<compile_context>
chip_gen: v6e
topology: v6e:2x2x1
jax: 0.10.0
libtpu: 0.0.40
codegen_flags: <defaults>
</compile_context>

<pallas_src>
import functools
import math

import jax
import jax.numpy as jnp
from jax import lax
from jax.experimental import pallas as pl
from jax.experimental.pallas import tpu as pltpu


def _mha_batch_kernel(x_ref, wq_ref, wk_ref, wv_ref, bq_ref, bk_ref, bv_ref,
                      wo_ref, bo_ref, o_ref, *, n_heads, causal):
    """One batch element per grid step; all heads unrolled inside.

    x_ref  : (1, S, D)             input block for this batch element
    wq/wk/wv_ref : (H, D, d_head)  pre-transposed per-head projection weights
                                   (scale folded into wq)
    bq/bk/bv_ref : (H, 1, d_head)  per-head projection biases (scale in bq)
    wo_ref : (H, d_head, D)        per-head slices of the out_proj weight
    bo_ref : (1, D)                out_proj bias
    o_ref  : (1, S, D)             output block (written once)
    """
    x = x_ref[0]                                              # (S, D) f32
    S = x.shape[0]
    D = o_ref.shape[2]

    if causal:                                                # static branch
        row = lax.broadcasted_iota(jnp.int32, (S, S), 0)
        col = lax.broadcasted_iota(jnp.int32, (S, S), 1)
        upper = col > row                                     # hoisted once

    # Start the accumulator from the out_proj bias (hoisted broadcast).
    acc = jnp.broadcast_to(bo_ref[...], (S, D)).astype(jnp.float32)

    for h in range(n_heads):                                  # static unroll
        # Per-head projections: plain NN matmuls (weights already (in, out)).
        q = jnp.dot(x, wq_ref[h], preferred_element_type=jnp.float32) + bq_ref[h]
        k = jnp.dot(x, wk_ref[h], preferred_element_type=jnp.float32) + bk_ref[h]
        v = jnp.dot(x, wv_ref[h], preferred_element_type=jnp.float32) + bv_ref[h]

        # q @ k^T via dot_general contracting the last dims (no explicit k.T).
        scores = lax.dot_general(q, k, (((1,), (1,)), ((), ())),
                                 preferred_element_type=jnp.float32)   # (S, S)
        if causal:
            # -inf survives the (already folded-in) scale, so this equals the
            # PyTorch mask-then-scale ordering exactly.
            scores = jnp.where(upper, -jnp.inf, scores)

        # Numerically stable softmax over keys; reciprocal runs on the EUP.
        m = jnp.max(scores, axis=-1, keepdims=True)
        e = jnp.exp(scores - m)
        p = e * pl.reciprocal(jnp.sum(e, axis=-1, keepdims=True), approx=True)

        ctx = jnp.dot(p, v, preferred_element_type=jnp.float32)       # (S, d_head)
        # out_proj(concat_h(ctx_h)) == sum_h ctx_h @ W_out_h  -> no concat.
        acc = acc + jnp.dot(ctx, wo_ref[h], preferred_element_type=jnp.float32)

    o_ref[0] = acc.astype(o_ref.dtype)


def self_attention_pallas(x, w_qkv, b_qkv, w_out, b_out, *, n_heads,
                          causal_mask=False):
    """x: (B, S, D) f32.  Weights in PyTorch Linear layout: W is (out, in)."""
    B, S, D = x.shape
    assert D % n_heads == 0
    d_head = D // n_heads
    scale = 1.0 / math.sqrt(d_head)

    # ---- one-time XLA-level weight re-layout (pre-transpose + per-head split)
    w_q, w_k, w_v = jnp.split(w_qkv, 3, axis=0)               # each (D, D)

    def per_head_in(w):        # (D_out, D_in) -> (H, D_in, d_head)
        return w.T.reshape(D, n_heads, d_head).transpose(1, 0, 2)

    wq_h = per_head_in(w_q) * scale                           # scale folded in
    wk_h = per_head_in(w_k)
    wv_h = per_head_in(w_v)

    b_q, b_k, b_v = jnp.split(b_qkv, 3)
    bq_h = b_q.reshape(n_heads, 1, d_head) * scale            # scale folded in
    bk_h = b_k.reshape(n_heads, 1, d_head)
    bv_h = b_v.reshape(n_heads, 1, d_head)

    wo_h = w_out.T.reshape(n_heads, d_head, D)                # (H, d_head, D)
    bo2 = b_out.reshape(1, D)

    kernel = functools.partial(_mha_batch_kernel, n_heads=n_heads,
                               causal=causal_mask)

    def resident(shape):       # full-extent block, loaded once, VMEM-resident
        return pl.BlockSpec(shape, lambda b, _s=shape: (0,) * len(_s))

    return pl.pallas_call(
        kernel,
        out_shape=jax.ShapeDtypeStruct((B, S, D), x.dtype),
        grid_spec=pltpu.PrefetchScalarGridSpec(
            num_scalar_prefetch=0,
            grid=(B,),
            in_specs=[
                pl.BlockSpec((1, S, D), lambda b: (b, 0, 0)),      # x
                resident((n_heads, D, d_head)),                    # Wq (scaled)
                resident((n_heads, D, d_head)),                    # Wk
                resident((n_heads, D, d_head)),                    # Wv
                resident((n_heads, 1, d_head)),                    # bq (scaled)
                resident((n_heads, 1, d_head)),                    # bk
                resident((n_heads, 1, d_head)),                    # bv
                resident((n_heads, d_head, D)),                    # Wout
                resident((1, D)),                                  # bout
            ],
            out_specs=pl.BlockSpec((1, S, D), lambda b: (b, 0, 0)),
        ),
        compiler_params=pltpu.CompilerParams(
            dimension_semantics=("parallel",)),
    )(x, wq_h, wk_h, wv_h, bq_h, bk_h, bv_h, wo_h, bo2)


def self_attention_ref(x, w_qkv, b_qkv, w_out, b_out, *, n_heads,
                       causal_mask=False):
    """Pure-JAX reference mirroring the PyTorch forward."""
    B, S, D = x.shape
    d_head = D // n_heads
    qkv = x @ w_qkv.T + b_qkv
    q, k, v = jnp.split(qkv, 3, axis=-1)

    def heads(t):
        return t.reshape(B, S, n_heads, d_head).transpose(0, 2, 1, 3)

    q, k, v = heads(q), heads(k), heads(v)
    w = jnp.einsum("bhqd,bhkd->bhqk", q, k)
    if causal_mask:
        mask = jnp.triu(jnp.ones((S, S), dtype=bool), k=1)
        w = jnp.where(mask, -jnp.inf, w)
    w = w / math.sqrt(d_head)
    p = jax.nn.softmax(w, axis=-1)
    out = jnp.einsum("bhqk,bhkd->bhqd", p, v)
    out = out.transpose(0, 2, 1, 3).reshape(B, S, D)
    return out @ w_out.T + b_out


if __name__ == "__main__":
    # Small shapes consistent with the module: B=2, S=8, d_embed=32, n_heads=4.
    B, S, D = 2, 8, 32
    n_heads = 4

    key = jax.random.PRNGKey(0)
    kx, k1, k2, k3, k4 = jax.random.split(key, 5)

    x = jax.random.normal(kx, (B, S, D), dtype=jnp.float32)

    # Deterministic parameter init (PyTorch Linear convention: (out, in)).
    bound_in = 1.0 / math.sqrt(D)
    w_qkv = jax.random.uniform(k1, (3 * D, D), jnp.float32, -bound_in, bound_in)
    b_qkv = jax.random.uniform(k2, (3 * D,), jnp.float32, -bound_in, bound_in)
    w_out = jax.random.uniform(k3, (D, D), jnp.float32, -bound_in, bound_in)
    b_out = jax.random.uniform(k4, (D,), jnp.float32, -bound_in, bound_in)

    ok = True
    for causal in (False, True):
        out = self_attention_pallas(x, w_qkv, b_qkv, w_out, b_out,
                                    n_heads=n_heads, causal_mask=causal)
        out = jax.block_until_ready(out)
        ref = self_attention_ref(x, w_qkv, b_qkv, w_out, b_out,
                                 n_heads=n_heads, causal_mask=causal)
        # Tolerance accounts for the approximate (EUP) reciprocal in softmax.
        if not jnp.allclose(out, ref, atol=2e-3, rtol=2e-3):
            ok = False

    print("KERNEL_OK" if ok else "KERNEL_MISMATCH")
</pallas_src>

<mosaic_0001>
module attributes {stable_mosaic.version = 11 : i64} {
  func.func @_mha_batch_kernel(%arg0: i32, %arg1: memref<1x8x32xf32, #tpu.memory_space<vmem>>, %arg2: memref<4x32x8xf32, #tpu.memory_space<vmem>>, %arg3: memref<4x32x8xf32, #tpu.memory_space<vmem>>, %arg4: memref<4x32x8xf32, #tpu.memory_space<vmem>>, %arg5: memref<4x1x8xf32, #tpu.memory_space<vmem>>, %arg6: memref<4x1x8xf32, #tpu.memory_space<vmem>>, %arg7: memref<4x1x8xf32, #tpu.memory_space<vmem>>, %arg8: memref<4x8x32xf32, #tpu.memory_space<vmem>>, %arg9: memref<1x32xf32, #tpu.memory_space<vmem>>, %arg10: memref<1x8x32xf32, #tpu.memory_space<vmem>>) attributes {dimension_semantics = [#tpu.dimension_semantics<parallel>], iteration_bounds = array<i64: 2>, scalar_prefetch = 0 : i64, scratch_operands = 0 : i64, tpu.core_type = #tpu.core_type<tc>, window_params = [{transform_indices = @transform_0, window_bounds = array<i64: 1, 8, 32>}, {pipeline_mode = #tpu.pipeline_mode<synchronous>, transform_indices = @transform_1, window_bounds = array<i64: 4, 32, 8>}, {pipeline_mode = #tpu.pipeline_mode<synchronous>, transform_indices = @transform_2, window_bounds = array<i64: 4, 32, 8>}, {pipeline_mode = #tpu.pipeline_mode<synchronous>, transform_indices = @transform_3, window_bounds = array<i64: 4, 32, 8>}, {pipeline_mode = #tpu.pipeline_mode<synchronous>, transform_indices = @transform_4, window_bounds = array<i64: 4, 1, 8>}, {pipeline_mode = #tpu.pipeline_mode<synchronous>, transform_indices = @transform_5, window_bounds = array<i64: 4, 1, 8>}, {pipeline_mode = #tpu.pipeline_mode<synchronous>, transform_indices = @transform_6, window_bounds = array<i64: 4, 1, 8>}, {pipeline_mode = #tpu.pipeline_mode<synchronous>, transform_indices = @transform_7, window_bounds = array<i64: 4, 8, 32>}, {pipeline_mode = #tpu.pipeline_mode<synchronous>, transform_indices = @transform_8, window_bounds = array<i64: 1, 32>}, {transform_indices = @transform_9, window_bounds = array<i64: 1, 8, 32>}]} {
    %c0 = arith.constant 0 : index
    %c0_0 = arith.constant 0 : index
    %c0_1 = arith.constant 0 : index
    %0 = vector.load %arg1[%c0, %c0_0, %c0_1] : memref<1x8x32xf32, #tpu.memory_space<vmem>>, vector<1x8x32xf32>
    %1 = vector.shape_cast %0 : vector<1x8x32xf32> to vector<8x32xf32>
    %c0_2 = arith.constant 0 : index
    %c0_3 = arith.constant 0 : index
    %2 = vector.load %arg9[%c0_2, %c0_3] : memref<1x32xf32, #tpu.memory_space<vmem>>, vector<1x32xf32>
    %3 = vector.shape_cast %2 : vector<1x32xf32> to vector<1x32xf32>
    %4 = vector.broadcast %3 : vector<1x32xf32> to vector<8x32xf32>
    %c0_4 = arith.constant 0 : index
    %c0_5 = arith.constant 0 : index
    %c0_6 = arith.constant 0 : index
    %5 = vector.load %arg2[%c0_4, %c0_5, %c0_6] : memref<4x32x8xf32, #tpu.memory_space<vmem>>, vector<1x32x8xf32>
    %6 = vector.shape_cast %5 : vector<1x32x8xf32> to vector<32x8xf32>
    %cst = arith.constant dense<0.000000e+00> : vector<8x8xf32>
    %7 = tpu.matmul %1, %6, %cst {dimension_numbers = #tpu.dot_dimension_numbers<[1], [0], [0], [1], [0, 0, 1, 1], [], []>} : vector<8x32xf32>, vector<32x8xf32>, vector<8x8xf32> -> vector<8x8xf32>
    %c0_7 = arith.constant 0 : index
    %c0_8 = arith.constant 0 : index
    %c0_9 = arith.constant 0 : index
    %8 = vector.load %arg5[%c0_7, %c0_8, %c0_9] : memref<4x1x8xf32, #tpu.memory_space<vmem>>, vector<1x1x8xf32>
    %9 = vector.shape_cast %8 : vector<1x1x8xf32> to vector<1x8xf32>
    %10 = vector.broadcast %9 : vector<1x8xf32> to vector<8x8xf32>
    %11 = arith.addf %7, %10 : vector<8x8xf32>
    %c0_10 = arith.constant 0 : index
    %c0_11 = arith.constant 0 : index
    %c0_12 = arith.constant 0 : index
    %12 = vector.load %arg3[%c0_10, %c0_11, %c0_12] : memref<4x32x8xf32, #tpu.memory_space<vmem>>, vector<1x32x8xf32>
    %13 = vector.shape_cast %12 : vector<1x32x8xf32> to vector<32x8xf32>
    %cst_13 = arith.constant dense<0.000000e+00> : vector<8x8xf32>
    %14 = tpu.matmul %1, %13, %cst_13 {dimension_numbers = #tpu.dot_dimension_numbers<[1], [0], [0], [1], [0, 0, 1, 1], [], []>} : vector<8x32xf32>, vector<32x8xf32>, vector<8x8xf32> -> vector<8x8xf32>
    %c0_14 = arith.constant 0 : index
    %c0_15 = arith.constant 0 : index
    %c0_16 = arith.constant 0 : index
    %15 = vector.load %arg6[%c0_14, %c0_15, %c0_16] : memref<4x1x8xf32, #tpu.memory_space<vmem>>, vector<1x1x8xf32>
    %16 = vector.shape_cast %15 : vector<1x1x8xf32> to vector<1x8xf32>
    %17 = vector.broadcast %16 : vector<1x8xf32> to vector<8x8xf32>
    %18 = arith.addf %14, %17 : vector<8x8xf32>
    %c0_17 = arith.constant 0 : index
    %c0_18 = arith.constant 0 : index
    %c0_19 = arith.constant 0 : index
    %19 = vector.load %arg4[%c0_17, %c0_18, %c0_19] : memref<4x32x8xf32, #tpu.memory_space<vmem>>, vector<1x32x8xf32>
    %20 = vector.shape_cast %19 : vector<1x32x8xf32> to vector<32x8xf32>
    %cst_20 = arith.constant dense<0.000000e+00> : vector<8x8xf32>
    %21 = tpu.matmul %1, %20, %cst_20 {dimension_numbers = #tpu.dot_dimension_numbers<[1], [0], [0], [1], [0, 0, 1, 1], [], []>} : vector<8x32xf32>, vector<32x8xf32>, vector<8x8xf32> -> vector<8x8xf32>
    %c0_21 = arith.constant 0 : index
    %c0_22 = arith.constant 0 : index
    %c0_23 = arith.constant 0 : index
    %22 = vector.load %arg7[%c0_21, %c0_22, %c0_23] : memref<4x1x8xf32, #tpu.memory_space<vmem>>, vector<1x1x8xf32>
    %23 = vector.shape_cast %22 : vector<1x1x8xf32> to vector<1x8xf32>
    %24 = vector.broadcast %23 : vector<1x8xf32> to vector<8x8xf32>
    %25 = arith.addf %21, %24 : vector<8x8xf32>
    %cst_24 = arith.constant dense<0.000000e+00> : vector<8x8xf32>
    %26 = tpu.matmul %11, %18, %cst_24 {dimension_numbers = #tpu.dot_dimension_numbers<[1], [1], [0], [0], [0, 0, 1, 0], [], []>} : vector<8x8xf32>, vector<8x8xf32>, vector<8x8xf32> -> vector<8x8xf32>
    %cst_25 = arith.constant dense<0xFF800000> : vector<8xf32>
    %27 = vector.multi_reduction <maximumf>, %26, %cst_25 [1] : vector<8x8xf32> to vector<8xf32>
    %28 = vector.shape_cast %27 : vector<8xf32> to vector<8x1xf32>
    %29 = vector.broadcast %28 : vector<8x1xf32> to vector<8x8xf32>
    %30 = arith.subf %26, %29 : vector<8x8xf32>
    %31 = math.exp %30 : vector<8x8xf32>
    %cst_26 = arith.constant dense<0.000000e+00> : vector<8xf32>
    %32 = vector.multi_reduction <add>, %31, %cst_26 [1] : vector<8x8xf32> to vector<8xf32>
    %33 = vector.shape_cast %32 : vector<8xf32> to vector<8x1xf32>
    %34 = tpu.reciprocal %33 {approx = true} : vector<8x1xf32> -> vector<8x1xf32>
    %35 = vector.broadcast %34 : vector<8x1xf32> to vector<8x8xf32>
    %36 = arith.mulf %31, %35 : vector<8x8xf32>
    %cst_27 = arith.constant dense<0.000000e+00> : vector<8x8xf32>
    %37 = tpu.matmul %36, %25, %cst_27 {dimension_numbers = #tpu.dot_dimension_numbers<[1], [0], [0], [1], [0, 0, 1, 1], [], []>} : vector<8x8xf32>, vector<8x8xf32>, vector<8x8xf32> -> vector<8x8xf32>
    %c0_28 = arith.constant 0 : index
    %c0_29 = arith.constant 0 : index
    %c0_30 = arith.constant 0 : index
    %38 = vector.load %arg8[%c0_28, %c0_29, %c0_30] : memref<4x8x32xf32, #tpu.memory_space<vmem>>, vector<1x8x32xf32>
    %39 = vector.shape_cast %38 : vector<1x8x32xf32> to vector<8x32xf32>
    %cst_31 = arith.constant dense<0.000000e+00> : vector<8x32xf32>
    %40 = tpu.matmul %37, %39, %cst_31 {dimension_numbers = #tpu.dot_dimension_numbers<[1], [0], [0], [1], [0, 0, 1, 1], [], []>} : vector<8x8xf32>, vector<8x32xf32>, vector<8x32xf32> -> vector<8x32xf32>
    %41 = arith.addf %4, %40 : vector<8x32xf32>
    %c1 = arith.constant 1 : index
    %c0_32 = arith.constant 0 : index
    %c0_33 = arith.constant 0 : index
    %42 = vector.load %arg2[%c1, %c0_32, %c0_33] : memref<4x32x8xf32, #tpu.memory_space<vmem>>, vector<1x32x8xf32>
    %43 = vector.shape_cast %42 : vector<1x32x8xf32> to vector<32x8xf32>
    %cst_34 = arith.constant dense<0.000000e+00> : vector<8x8xf32>
    %44 = tpu.matmul %1, %43, %cst_34 {dimension_numbers = #tpu.dot_dimension_numbers<[1], [0], [0], [1], [0, 0, 1, 1], [], []>} : vector<8x32xf32>, vector<32x8xf32>, vector<8x8xf32> -> vector<8x8xf32>
    %c1_35 = arith.constant 1 : index
    %c0_36 = arith.constant 0 : index
    %c0_37 = arith.constant 0 : index
    %45 = vector.load %arg5[%c1_35, %c0_36, %c0_37] : memref<4x1x8xf32, #tpu.memory_space<vmem>>, vector<1x1x8xf32>
    %46 = vector.shape_cast %45 : vector<1x1x8xf32> to vector<1x8xf32>
    %47 = vector.broadcast %46 : vector<1x8xf32> to vector<8x8xf32>
    %48 = arith.addf %44, %47 : vector<8x8xf32>
    %c1_38 = arith.constant 1 : index
    %c0_39 = arith.constant 0 : index
    %c0_40 = arith.constant 0 : index
    %49 = vector.load %arg3[%c1_38, %c0_39, %c0_40] : memref<4x32x8xf32, #tpu.memory_space<vmem>>, vector<1x32x8xf32>
    %50 = vector.shape_cast %49 : vector<1x32x8xf32> to vector<32x8xf32>
    %cst_41 = arith.constant dense<0.000000e+00> : vector<8x8xf32>
    %51 = tpu.matmul %1, %50, %cst_41 {dimension_numbers = #tpu.dot_dimension_numbers<[1], [0], [0], [1], [0, 0, 1, 1], [], []>} : vector<8x32xf32>, vector<32x8xf32>, vector<8x8xf32> -> vector<8x8xf32>
    %c1_42 = arith.constant 1 : index
    %c0_43 = arith.constant 0 : index
    %c0_44 = arith.constant 0 : index
    %52 = vector.load %arg6[%c1_42, %c0_43, %c0_44] : memref<4x1x8xf32, #tpu.memory_space<vmem>>, vector<1x1x8xf32>
    %53 = vector.shape_cast %52 : vector<1x1x8xf32> to vector<1x8xf32>
    %54 = vector.broadcast %53 : vector<1x8xf32> to vector<8x8xf32>
    %55 = arith.addf %51, %54 : vector<8x8xf32>
    %c1_45 = arith.constant 1 : index
    %c0_46 = arith.constant 0 : index
    %c0_47 = arith.constant 0 : index
    %56 = vector.load %arg4[%c1_45, %c0_46, %c0_47] : memref<4x32x8xf32, #tpu.memory_space<vmem>>, vector<1x32x8xf32>
    %57 = vector.shape_cast %56 : vector<1x32x8xf32> to vector<32x8xf32>
    %cst_48 = arith.constant dense<0.000000e+00> : vector<8x8xf32>
    %58 = tpu.matmul %1, %57, %cst_48 {dimension_numbers = #tpu.dot_dimension_numbers<[1], [0], [0], [1], [0, 0, 1, 1], [], []>} : vector<8x32xf32>, vector<32x8xf32>, vector<8x8xf32> -> vector<8x8xf32>
    %c1_49 = arith.constant 1 : index
    %c0_50 = arith.constant 0 : index
    %c0_51 = arith.constant 0 : index
    %59 = vector.load %arg7[%c1_49, %c0_50, %c0_51] : memref<4x1x8xf32, #tpu.memory_space<vmem>>, vector<1x1x8xf32>
    %60 = vector.shape_cast %59 : vector<1x1x8xf32> to vector<1x8xf32>
    %61 = vector.broadcast %60 : vector<1x8xf32> to vector<8x8xf32>
    %62 = arith.addf %58, %61 : vector<8x8xf32>
    %cst_52 = arith.constant dense<0.000000e+00> : vector<8x8xf32>
    %63 = tpu.matmul %48, %55, %cst_52 {dimension_numbers = #tpu.dot_dimension_numbers<[1], [1], [0], [0], [0, 0, 1, 0], [], []>} : vector<8x8xf32>, vector<8x8xf32>, vector<8x8xf32> -> vector<8x8xf32>
    %cst_53 = arith.constant dense<0xFF800000> : vector<8xf32>
    %64 = vector.multi_reduction <maximumf>, %63, %cst_53 [1] : vector<8x8xf32> to vector<8xf32>
    %65 = vector.shape_cast %64 : vector<8xf32> to vector<8x1xf32>
    %66 = vector.broadcast %65 : vector<8x1xf32> to vector<8x8xf32>
    %67 = arith.subf %63, %66 : vector<8x8xf32>
    %68 = math.exp %67 : vector<8x8xf32>
    %cst_54 = arith.constant dense<0.000000e+00> : vector<8xf32>
    %69 = vector.multi_reduction <add>, %68, %cst_54 [1] : vector<8x8xf32> to vector<8xf32>
    %70 = vector.shape_cast %69 : vector<8xf32> to vector<8x1xf32>
    %71 = tpu.reciprocal %70 {approx = true} : vector<8x1xf32> -> vector<8x1xf32>
    %72 = vector.broadcast %71 : vector<8x1xf32> to vector<8x8xf32>
    %73 = arith.mulf %68, %72 : vector<8x8xf32>
    %cst_55 = arith.constant dense<0.000000e+00> : vector<8x8xf32>
    %74 = tpu.matmul %73, %62, %cst_55 {dimension_numbers = #tpu.dot_dimension_numbers<[1], [0], [0], [1], [0, 0, 1, 1], [], []>} : vector<8x8xf32>, vector<8x8xf32>, vector<8x8xf32> -> vector<8x8xf32>
    %c1_56 = arith.constant 1 : index
    %c0_57 = arith.constant 0 : index
    %c0_58 = arith.constant 0 : index
    %75 = vector.load %arg8[%c1_56, %c0_57, %c0_58] : memref<4x8x32xf32, #tpu.memory_space<vmem>>, vector<1x8x32xf32>
    %76 = vector.shape_cast %75 : vector<1x8x32xf32> to vector<8x32xf32>
    %cst_59 = arith.constant dense<0.000000e+00> : vector<8x32xf32>
    %77 = tpu.matmul %74, %76, %cst_59 {dimension_numbers = #tpu.dot_dimension_numbers<[1], [0], [0], [1], [0, 0, 1, 1], [], []>} : vector<8x8xf32>, vector<8x32xf32>, vector<8x32xf32> -> vector<8x32xf32>
    %78 = arith.addf %41, %77 : vector<8x32xf32>
    %c2 = arith.constant 2 : index
    %c0_60 = arith.constant 0 : index
    %c0_61 = arith.constant 0 : index
    %79 = vector.load %arg2[%c2, %c0_60, %c0_61] : memref<4x32x8xf32, #tpu.memory_space<vmem>>, vector<1x32x8xf32>
    %80 = vector.shape_cast %79 : vector<1x32x8xf32> to vector<32x8xf32>
    %cst_62 = arith.constant dense<0.000000e+00> : vector<8x8xf32>
    %81 = tpu.matmul %1, %80, %cst_62 {dimension_numbers = #tpu.dot_dimension_numbers<[1], [0], [0], [1], [0, 0, 1, 1], [], []>} : vector<8x32xf32>, vector<32x8xf32>, vector<8x8xf32> -> vector<8x8xf32>
    %c2_63 = arith.constant 2 : index
    %c0_64 = arith.constant 0 : index
    %c0_65 = arith.constant 0 : index
    %82 = vector.load %arg5[%c2_63, %c0_64, %c0_65] : memref<4x1x8xf32, #tpu.memory_space<vmem>>, vector<1x1x8xf32>
    %83 = vector.shape_cast %82 : vector<1x1x8xf32> to vector<1x8xf32>
    %84 = vector.broadcast %83 : vector<1x8xf32> to vector<8x8xf32>
    %85 = arith.addf %81, %84 : vector<8x8xf32>
    %c2_66 = arith.constant 2 : index
    %c0_67 = arith.constant 0 : index
    %c0_68 = arith.constant 0 : index
    %86 = vector.load %arg3[%c2_66, %c0_67, %c0_68] : memref<4x32x8xf32, #tpu.memory_space<vmem>>, vector<1x32x8xf32>
    %87 = vector.shape_cast %86 : vector<1x32x8xf32> to vector<32x8xf32>
    %cst_69 = arith.constant dense<0.000000e+00> : vector<8x8xf32>
    %88 = tpu.matmul %1, %87, %cst_69 {dimension_numbers = #tpu.dot_dimension_numbers<[1], [0], [0], [1], [0, 0, 1, 1], [], []>} : vector<8x32xf32>, vector<32x8xf32>, vector<8x8xf32> -> vector<8x8xf32>
    %c2_70 = arith.constant 2 : index
    %c0_71 = arith.constant 0 : index
    %c0_72 = arith.constant 0 : index
    %89 = vector.load %arg6[%c2_70, %c0_71, %c0_72] : memref<4x1x8xf32, #tpu.memory_space<vmem>>, vector<1x1x8xf32>
    %90 = vector.shape_cast %89 : vector<1x1x8xf32> to vector<1x8xf32>
    %91 = vector.broadcast %90 : vector<1x8xf32> to vector<8x8xf32>
    %92 = arith.addf %88, %91 : vector<8x8xf32>
    %c2_73 = arith.constant 2 : index
    %c0_74 = arith.constant 0 : index
    %c0_75 = arith.constant 0 : index
    %93 = vector.load %arg4[%c2_73, %c0_74, %c0_75] : memref<4x32x8xf32, #tpu.memory_space<vmem>>, vector<1x32x8xf32>
    %94 = vector.shape_cast %93 : vector<1x32x8xf32> to vector<32x8xf32>
    %cst_76 = arith.constant dense<0.000000e+00> : vector<8x8xf32>
    %95 = tpu.matmul %1, %94, %cst_76 {dimension_numbers = #tpu.dot_dimension_numbers<[1], [0], [0], [1], [0, 0, 1, 1], [], []>} : vector<8x32xf32>, vector<32x8xf32>, vector<8x8xf32> -> vector<8x8xf32>
    %c2_77 = arith.constant 2 : index
    %c0_78 = arith.constant 0 : index
    %c0_79 = arith.constant 0 : index
    %96 = vector.load %arg7[%c2_77, %c0_78, %c0_79] : memref<4x1x8xf32, #tpu.memory_space<vmem>>, vector<1x1x8xf32>
    %97 = vector.shape_cast %96 : vector<1x1x8xf32> to vector<1x8xf32>
    %98 = vector.broadcast %97 : vector<1x8xf32> to vector<8x8xf32>
    %99 = arith.addf %95, %98 : vector<8x8xf32>
    %cst_80 = arith.constant dense<0.000000e+00> : vector<8x8xf32>
    %100 = tpu.matmul %85, %92, %cst_80 {dimension_numbers = #tpu.dot_dimension_numbers<[1], [1], [0], [0], [0, 0, 1, 0], [], []>} : vector<8x8xf32>, vector<8x8xf32>, vector<8x8xf32> -> vector<8x8xf32>
    %cst_81 = arith.constant dense<0xFF800000> : vector<8xf32>
    %101 = vector.multi_reduction <maximumf>, %100, %cst_81 [1] : vector<8x8xf32> to vector<8xf32>
    %102 = vector.shape_cast %101 : vector<8xf32> to vector<8x1xf32>
    %103 = vector.broadcast %102 : vector<8x1xf32> to vector<8x8xf32>
    %104 = arith.subf %100, %103 : vector<8x8xf32>
    %105 = math.exp %104 : vector<8x8xf32>
    %cst_82 = arith.constant dense<0.000000e+00> : vector<8xf32>
    %106 = vector.multi_reduction <add>, %105, %cst_82 [1] : vector<8x8xf32> to vector<8xf32>
    %107 = vector.shape_cast %106 : vector<8xf32> to vector<8x1xf32>
    %108 = tpu.reciprocal %107 {approx = true} : vector<8x1xf32> -> vector<8x1xf32>
    %109 = vector.broadcast %108 : vector<8x1xf32> to vector<8x8xf32>
    %110 = arith.mulf %105, %109 : vector<8x8xf32>
    %cst_83 = arith.constant dense<0.000000e+00> : vector<8x8xf32>
    %111 = tpu.matmul %110, %99, %cst_83 {dimension_numbers = #tpu.dot_dimension_numbers<[1], [0], [0], [1], [0, 0, 1, 1], [], []>} : vector<8x8xf32>, vector<8x8xf32>, vector<8x8xf32> -> vector<8x8xf32>
    %c2_84 = arith.constant 2 : index
    %c0_85 = arith.constant 0 : index
    %c0_86 = arith.constant 0 : index
    %112 = vector.load %arg8[%c2_84, %c0_85, %c0_86] : memref<4x8x32xf32, #tpu.memory_space<vmem>>, vector<1x8x32xf32>
    %113 = vector.shape_cast %112 : vector<1x8x32xf32> to vector<8x32xf32>
    %cst_87 = arith.constant dense<0.000000e+00> : vector<8x32xf32>
    %114 = tpu.matmul %111, %113, %cst_87 {dimension_numbers = #tpu.dot_dimension_numbers<[1], [0], [0], [1], [0, 0, 1, 1], [], []>} : vector<8x8xf32>, vector<8x32xf32>, vector<8x32xf32> -> vector<8x32xf32>
    %115 = arith.addf %78, %114 : vector<8x32xf32>
    %c3 = arith.constant 3 : index
    %c0_88 = arith.constant 0 : index
    %c0_89 = arith.constant 0 : index
    %116 = vector.load %arg2[%c3, %c0_88, %c0_89] : memref<4x32x8xf32, #tpu.memory_space<vmem>>, vector<1x32x8xf32>
    %117 = vector.shape_cast %116 : vector<1x32x8xf32> to vector<32x8xf32>
    %cst_90 = arith.constant dense<0.000000e+00> : vector<8x8xf32>
    %118 = tpu.matmul %1, %117, %cst_90 {dimension_numbers = #tpu.dot_dimension_numbers<[1], [0], [0], [1], [0, 0, 1, 1], [], []>} : vector<8x32xf32>, vector<32x8xf32>, vector<8x8xf32> -> vector<8x8xf32>
    %c3_91 = arith.constant 3 : index
    %c0_92 = arith.constant 0 : index
    %c0_93 = arith.constant 0 : index
    %119 = vector.load %arg5[%c3_91, %c0_92, %c0_93] : memref<4x1x8xf32, #tpu.memory_space<vmem>>, vector<1x1x8xf32>
    %120 = vector.shape_cast %119 : vector<1x1x8xf32> to vector<1x8xf32>
    %121 = vector.broadcast %120 : vector<1x8xf32> to vector<8x8xf32>
    %122 = arith.addf %118, %121 : vector<8x8xf32>
    %c3_94 = arith.constant 3 : index
    %c0_95 = arith.constant 0 : index
    %c0_96 = arith.constant 0 : index
    %123 = vector.load %arg3[%c3_94, %c0_95, %c0_96] : memref<4x32x8xf32, #tpu.memory_space<vmem>>, vector<1x32x8xf32>
    %124 = vector.shape_cast %123 : vector<1x32x8xf32> to vector<32x8xf32>
    %cst_97 = arith.constant dense<0.000000e+00> : vector<8x8xf32>
    %125 = tpu.matmul %1, %124, %cst_97 {dimension_numbers = #tpu.dot_dimension_numbers<[1], [0], [0], [1], [0, 0, 1, 1], [], []>} : vector<8x32xf32>, vector<32x8xf32>, vector<8x8xf32> -> vector<8x8xf32>
    %c3_98 = arith.constant 3 : index
    %c0_99 = arith.constant 0 : index
    %c0_100 = arith.constant 0 : index
    %126 = vector.load %arg6[%c3_98, %c0_99, %c0_100] : memref<4x1x8xf32, #tpu.memory_space<vmem>>, vector<1x1x8xf32>
    %127 = vector.shape_cast %126 : vector<1x1x8xf32> to vector<1x8xf32>
    %128 = vector.broadcast %127 : vector<1x8xf32> to vector<8x8xf32>
    %129 = arith.addf %125, %128 : vector<8x8xf32>
    %c3_101 = arith.constant 3 : index
    %c0_102 = arith.constant 0 : index
    %c0_103 = arith.constant 0 : index
    %130 = vector.load %arg4[%c3_101, %c0_102, %c0_103] : memref<4x32x8xf32, #tpu.memory_space<vmem>>, vector<1x32x8xf32>
    %131 = vector.shape_cast %130 : vector<1x32x8xf32> to vector<32x8xf32>
    %cst_104 = arith.constant dense<0.000000e+00> : vector<8x8xf32>
    %132 = tpu.matmul %1, %131, %cst_104 {dimension_numbers = #tpu.dot_dimension_numbers<[1], [0], [0], [1], [0, 0, 1, 1], [], []>} : vector<8x32xf32>, vector<32x8xf32>, vector<8x8xf32> -> vector<8x8xf32>
    %c3_105 = arith.constant 3 : index
    %c0_106 = arith.constant 0 : index
    %c0_107 = arith.constant 0 : index
    %133 = vector.load %arg7[%c3_105, %c0_106, %c0_107] : memref<4x1x8xf32, #tpu.memory_space<vmem>>, vector<1x1x8xf32>
    %134 = vector.shape_cast %133 : vector<1x1x8xf32> to vector<1x8xf32>
    %135 = vector.broadcast %134 : vector<1x8xf32> to vector<8x8xf32>
    %136 = arith.addf %132, %135 : vector<8x8xf32>
    %cst_108 = arith.constant dense<0.000000e+00> : vector<8x8xf32>
    %137 = tpu.matmul %122, %129, %cst_108 {dimension_numbers = #tpu.dot_dimension_numbers<[1], [1], [0], [0], [0, 0, 1, 0], [], []>} : vector<8x8xf32>, vector<8x8xf32>, vector<8x8xf32> -> vector<8x8xf32>
    %cst_109 = arith.constant dense<0xFF800000> : vector<8xf32>
    %138 = vector.multi_reduction <maximumf>, %137, %cst_109 [1] : vector<8x8xf32> to vector<8xf32>
    %139 = vector.shape_cast %138 : vector<8xf32> to vector<8x1xf32>
    %140 = vector.broadcast %139 : vector<8x1xf32> to vector<8x8xf32>
    %141 = arith.subf %137, %140 : vector<8x8xf32>
    %142 = math.exp %141 : vector<8x8xf32>
    %cst_110 = arith.constant dense<0.000000e+00> : vector<8xf32>
    %143 = vector.multi_reduction <add>, %142, %cst_110 [1] : vector<8x8xf32> to vector<8xf32>
    %144 = vector.shape_cast %143 : vector<8xf32> to vector<8x1xf32>
    %145 = tpu.reciprocal %144 {approx = true} : vector<8x1xf32> -> vector<8x1xf32>
    %146 = vector.broadcast %145 : vector<8x1xf32> to vector<8x8xf32>
    %147 = arith.mulf %142, %146 : vector<8x8xf32>
    %cst_111 = arith.constant dense<0.000000e+00> : vector<8x8xf32>
    %148 = tpu.matmul %147, %136, %cst_111 {dimension_numbers = #tpu.dot_dimension_numbers<[1], [0], [0], [1], [0, 0, 1, 1], [], []>} : vector<8x8xf32>, vector<8x8xf32>, vector<8x8xf32> -> vector<8x8xf32>
    %c3_112 = arith.constant 3 : index
    %c0_113 = arith.constant 0 : index
    %c0_114 = arith.constant 0 : index
    %149 = vector.load %arg8[%c3_112, %c0_113, %c0_114] : memref<4x8x32xf32, #tpu.memory_space<vmem>>, vector<1x8x32xf32>
    %150 = vector.shape_cast %149 : vector<1x8x32xf32> to vector<8x32xf32>
    %cst_115 = arith.constant dense<0.000000e+00> : vector<8x32xf32>
    %151 = tpu.matmul %148, %150, %cst_115 {dimension_numbers = #tpu.dot_dimension_numbers<[1], [0], [0], [1], [0, 0, 1, 1], [], []>} : vector<8x8xf32>, vector<8x32xf32>, vector<8x32xf32> -> vector<8x32xf32>
    %152 = arith.addf %115, %151 : vector<8x32xf32>
    %c0_116 = arith.constant 0 : index
    %c0_117 = arith.constant 0 : index
    %c0_118 = arith.constant 0 : index
    %153 = vector.load %arg10[%c0_116, %c0_117, %c0_118] : memref<1x8x32xf32, #tpu.memory_space<vmem>>, vector<1x8x32xf32>
    %154 = vector.shape_cast %153 : vector<1x8x32xf32> to vector<8x32xf32>
    %155 = vector.shape_cast %152 : vector<8x32xf32> to vector<1x8x32xf32>
    tpu.vector_store %arg10[%c0_116, %c0_117, %c0_118], %155 {strides = array<i32>} : memref<1x8x32xf32, #tpu.memory_space<vmem>>, vector<1x8x32xf32>,
    return
  }
  func.func @transform_0(%arg0: i32) -> (i32, i32, i32) {
    %c0_i32 = arith.constant 0 : i32
    %c0_i32_0 = arith.constant 0 : i32
    %c0_i32_1 = arith.constant 0 : i32
    return %arg0, %c0_i32, %c0_i32_0 : i32, i32, i32
  }
  func.func @transform_1(%arg0: i32) -> (i32, i32, i32) {
    %c0_i32 = arith.constant 0 : i32
    %c0_i32_0 = arith.constant 0 : i32
    %c0_i32_1 = arith.constant 0 : i32
    %c0_i32_2 = arith.constant 0 : i32
    return %c0_i32, %c0_i32_0, %c0_i32_1 : i32, i32, i32
  }
  func.func @transform_2(%arg0: i32) -> (i32, i32, i32) {
    %c0_i32 = arith.constant 0 : i32
    %c0_i32_0 = arith.constant 0 : i32
    %c0_i32_1 = arith.constant 0 : i32
    %c0_i32_2 = arith.constant 0 : i32
    return %c0_i32, %c0_i32_0, %c0_i32_1 : i32, i32, i32
  }
  func.func @transform_3(%arg0: i32) -> (i32, i32, i32) {
    %c0_i32 = arith.constant 0 : i32
    %c0_i32_0 = arith.constant 0 : i32
    %c0_i32_1 = arith.constant 0 : i32
    %c0_i32_2 = arith.constant 0 : i32
    return %c0_i32, %c0_i32_0, %c0_i32_1 : i32, i32, i32
  }
  func.func @transform_4(%arg0: i32) -> (i32, i32, i32) {
    %c0_i32 = arith.constant 0 : i32
    %c0_i32_0 = arith.constant 0 : i32
    %c0_i32_1 = arith.constant 0 : i32
    %c0_i32_2 = arith.constant 0 : i32
    return %c0_i32, %c0_i32_0, %c0_i32_1 : i32, i32, i32
  }
  func.func @transform_5(%arg0: i32) -> (i32, i32, i32) {
    %c0_i32 = arith.constant 0 : i32
    %c0_i32_0 = arith.constant 0 : i32
    %c0_i32_1 = arith.constant 0 : i32
    %c0_i32_2 = arith.constant 0 : i32
    return %c0_i32, %c0_i32_0, %c0_i32_1 : i32, i32, i32
  }
  func.func @transform_6(%arg0: i32) -> (i32, i32, i32) {
    %c0_i32 = arith.constant 0 : i32
    %c0_i32_0 = arith.constant 0 : i32
    %c0_i32_1 = arith.constant 0 : i32
    %c0_i32_2 = arith.constant 0 : i32
    return %c0_i32, %c0_i32_0, %c0_i32_1 : i32, i32, i32
  }
  func.func @transform_7(%arg0: i32) -> (i32, i32, i32) {
    %c0_i32 = arith.constant 0 : i32
    %c0_i32_0 = arith.constant 0 : i32
    %c0_i32_1 = arith.constant 0 : i32
    %c0_i32_2 = arith.constant 0 : i32
    return %c0_i32, %c0_i32_0, %c0_i32_1 : i32, i32, i32
  }
  func.func @transform_8(%arg0: i32) -> (i32, i32) {
    %c0_i32 = arith.constant 0 : i32
    %c0_i32_0 = arith.constant 0 : i32
    %c0_i32_1 = arith.constant 0 : i32
    return %c0_i32, %c0_i32_0 : i32, i32
  }
  func.func @transform_9(%arg0: i32) -> (i32, i32, i32) {
    %c0_i32 = arith.constant 0 : i32
    %c0_i32_0 = arith.constant 0 : i32
    %c0_i32_1 = arith.constant 0 : i32
    return %arg0, %c0_i32, %c0_i32_0 : i32, i32, i32
  }
}

</mosaic_0001>

<llo_original>
// kernel: tpu_custom_call.1
$region0: #{tpu_custom_call.1}
  #allocation0 [shape = 'u32[]', space=smem, size = 0x4, offset = 0x4, fixed_abs, tag = 'smem constant byte address 0x4 - core index']
  #allocation1 [shape = 'u32[144,128]{1,0:T(1,128)}', space=vmem, size = 0x12000, scoped, tag = 'internal scratch']
  %s0 = inlined_call_operand.vmem [shape: f32[2,8,32], index: 0, kind: input, shape index: {}]
  %s1 = inlined_call_operand.vmem [shape: f32[4,32,8], index: 1, kind: input, shape index: {}]
  %s2 = inlined_call_operand.vmem [shape: f32[4,32,8], index: 2, kind: input, shape index: {}]
  %s3 = inlined_call_operand.vmem [shape: f32[4,32,8], index: 3, kind: input, shape index: {}]
  %s4 = inlined_call_operand.vmem [shape: f32[4,1,8], index: 4, kind: input, shape index: {}]
  %s5 = inlined_call_operand.vmem [shape: f32[4,1,8], index: 5, kind: input, shape index: {}]
  %s6 = inlined_call_operand.vmem [shape: f32[4,1,8], index: 6, kind: input, shape index: {}]
  %s7 = inlined_call_operand.vmem [shape: f32[4,8,32], index: 7, kind: input, shape index: {}]
  %s8 = inlined_call_operand.vmem [shape: f32[1,32], index: 8, kind: input, shape index: {}]
  %s9 = inlined_call_operand.hbm [shape: f32[2,8,32], index: 9, kind: output, shape index: {}]
  %s10 = sld [smem:[#allocation0]]
  $region69: #{tpu_custom_call.1} parent=0
    _
  %s12 = ssub.s32 1, %s10
  %s13 = scalar_select 0, %s12, %s10
  $region1: #{tpu_custom_call.1} parent=0
    #allocation2 [shape = 'u8[8192]{0}', space=vmem, size = 0x2000, scoped, tag = 'output window, operand 0']
    #allocation3 [shape = 's32[2]{0}', space=sflag, size = 0x8, scoped, tag = 'scoped memory for tpu_custom_call.1']
    %14 = vsyncpa [#allocation3], 0
    %s15 = scalar_lea.sflag [#allocation3], 1
    %16 = vsyncpa %s15, 0
    loop: start=0, step=1, limit=4
    $region2: #{tpu_custom_call.1} parent=1 // loop_pre_header
      _
    $region3: #{tpu_custom_call.1} parent=1 // loop_header
      %s18 = sphi 0, %s22
      %p19 = scmp.ge.s32.totalorder %s18, 4
      %s28 = sphi 0, %s30
      %s31 = sphi 0, %s28
      %s32 = sphi 0, %s31
      %s48 = sphi 0, %s32
      %s52 = sphi 0, %s52
      %s54 = sphi 0, %s52
      %s55 = sphi 0, %s54
      %s69 = sphi 0, %s55
      %s73 = sphi 0, %s73
      %s75 = sphi 0, %s73
      %s76 = sphi 0, %s75
      %s90 = sphi 0, %s76
      %s94 = sphi 0, %s94
      %s96 = sphi 0, %s94
      %s97 = sphi 0, %s96
      %s111 = sphi 0, %s97
      %s115 = sphi 0, %s115
      %s117 = sphi 0, %s115
      %s118 = sphi 0, %s117
      %s132 = sphi 0, %s118
      %s136 = sphi 0, %s136
      %s138 = sphi 0, %s136
      %s139 = sphi 0, %s138
      %s153 = sphi 0, %s139
      %s157 = sphi 0, %s157
      %s159 = sphi 0, %s157
      %s160 = sphi 0, %s159
      %s174 = sphi 0, %s160
      %s178 = sphi 0, %s178
      %s180 = sphi 0, %s178
      %s181 = sphi 0, %s180
      %s195 = sphi 0, %s181
      %s199 = sphi 0, %s199
      %s201 = sphi 0, %s199
      %s202 = sphi 0, %s201
      %s216 = sphi 0, %s202
      %s222 = sphi 0, %s224
      %s225 = sphi 0, %s222
      %s226 = sphi 0, %s225
      %s242 = sphi 0, %s226
    $region4: #{tpu_custom_call.1} parent=1 // loop_header_branch
      %21 = sbr.rel (%p19) target = $region8
    $region5: #{tpu_custom_call.1} parent=1 // loop_body
      %s23 = ssub.s32 %s18, 1
      %s24 = ssub.s32 %s18, 2
      %s25 = sadd.s32 %s18, 1
      %s26 = ssub.s32 %s18, %s25
      %p27 = scmp.eq.s32.totalorder %s26, 0
      %s29 = sadd.s32 %s28, 1
      %s30 = scalar_select %p27, %s28, %s29
      %p33 = pneg %p27
      %p34 = scmp.eq.s32.totalorder %s18, 1
      %p35 = por %p33, %p34
      %p36 = scmp.ne.s32.totalorder %s28, %s31
      %p37 = scmp.eq.s32.totalorder %s18, 0
      %p38 = por %p36, %p37
      %p39 = scmp.ne.s32.totalorder %s28, %s31
      %p40 = scmp.eq.s32.totalorder %s23, 1
      %p41 = por %p39, %p40
      %p42 = scmp.ne.s32.totalorder %s31, %s32
      %p43 = scmp.eq.s32.totalorder %s23, 0
      %p44 = por %p42, %p43
      %p45 = scmp.ne.s32.totalorder %s31, %s32
      %p46 = scmp.eq.s32.totalorder %s24, 1
      %p47 = por %p45, %p46
      %p49 = scmp.ne.s32.totalorder %s32, %s48
      %p50 = scmp.eq.s32.totalorder %s24, 0
      %p51 = por %p49, %p50
      %s53 = sadd.s32 %s52, 1
      %p56 = scmp.eq.s32.totalorder %s18, 1
      %p57 = scmp.ne.s32.totalorder %s52, %s54
      %p58 = scmp.eq.s32.totalorder %s18, 0
      %p59 = por %p57, %p58
      %p60 = scmp.ne.s32.totalorder %s52, %s54
      %p61 = scmp.eq.s32.totalorder %s23, 1
      %p62 = por %p60, %p61
      %p63 = scmp.ne.s32.totalorder %s54, %s55
      %p64 = scmp.eq.s32.totalorder %s23, 0
      %p65 = por %p63, %p64
      %p66 = scmp.ne.s32.totalorder %s54, %s55
      %p67 = scmp.eq.s32.totalorder %s24, 1
      %p68 = por %p66, %p67
      %p70 = scmp.ne.s32.totalorder %s55, %s69
      %p71 = scmp.eq.s32.totalorder %s24, 0
      %p72 = por %p70, %p71
      %s74 = sadd.s32 %s73, 1
      %p77 = scmp.eq.s32.totalorder %s18, 1
      %p78 = scmp.ne.s32.totalorder %s73, %s75
      %p79 = scmp.eq.s32.totalorder %s18, 0
      %p80 = por %p78, %p79
      %p81 = scmp.ne.s32.totalorder %s73, %s75
      %p82 = scmp.eq.s32.totalorder %s23, 1
      %p83 = por %p81, %p82
      %p84 = scmp.ne.s32.totalorder %s75, %s76
      %p85 = scmp.eq.s32.totalorder %s23, 0
      %p86 = por %p84, %p85
      %p87 = scmp.ne.s32.totalorder %s75, %s76
      %p88 = scmp.eq.s32.totalorder %s24, 1
      %p89 = por %p87, %p88
      %p91 = scmp.ne.s32.totalorder %s76, %s90
      %p92 = scmp.eq.s32.totalorder %s24, 0
      %p93 = por %p91, %p92
      %s95 = sadd.s32 %s94, 1
      %p98 = scmp.eq.s32.totalorder %s18, 1
      %p99 = scmp.ne.s32.totalorder %s94, %s96
      %p100 = scmp.eq.s32.totalorder %s18, 0
      %p101 = por %p99, %p100
      %p102 = scmp.ne.s32.totalorder %s94, %s96
      %p103 = scmp.eq.s32.totalorder %s23, 1
      %p104 = por %p102, %p103
      %p105 = scmp.ne.s32.totalorder %s96, %s97
      %p106 = scmp.eq.s32.totalorder %s23, 0
      %p107 = por %p105, %p106
      %p108 = scmp.ne.s32.totalorder %s96, %s97
      %p109 = scmp.eq.s32.totalorder %s24, 1
      %p110 = por %p108, %p109
      %p112 = scmp.ne.s32.totalorder %s97, %s111
      %p113 = scmp.eq.s32.totalorder %s24, 0
      %p114 = por %p112, %p113
      %s116 = sadd.s32 %s115, 1
      %p119 = scmp.eq.s32.totalorder %s18, 1
      %p120 = scmp.ne.s32.totalorder %s115, %s117
      %p121 = scmp.eq.s32.totalorder %s18, 0
      %p122 = por %p120, %p121
      %p123 = scmp.ne.s32.totalorder %s115, %s117
      %p124 = scmp.eq.s32.totalorder %s23, 1
      %p125 = por %p123, %p124
      %p126 = scmp.ne.s32.totalorder %s117, %s118
      %p127 = scmp.eq.s32.totalorder %s23, 0
      %p128 = por %p126, %p127
      %p129 = scmp.ne.s32.totalorder %s117, %s118
      %p130 = scmp.eq.s32.totalorder %s24, 1
      %p131 = por %p129, %p130
      %p133 = scmp.ne.s32.totalorder %s118, %s132
      %p134 = scmp.eq.s32.totalorder %s24, 0
      %p135 = por %p133, %p134
      %s137 = sadd.s32 %s136, 1
      %p140 = scmp.eq.s32.totalorder %s18, 1
      %p141 = scmp.ne.s32.totalorder %s136, %s138
      %p142 = scmp.eq.s32.totalorder %s18, 0
      %p143 = por %p141, %p142
      %p144 = scmp.ne.s32.totalorder %s136, %s138
      %p145 = scmp.eq.s32.totalorder %s23, 1
      %p146 = por %p144, %p145
      %p147 = scmp.ne.s32.totalorder %s138, %s139
      %p148 = scmp.eq.s32.totalorder %s23, 0
      %p149 = por %p147, %p148
      %p150 = scmp.ne.s32.totalorder %s138, %s139
      %p151 = scmp.eq.s32.totalorder %s24, 1
      %p152 = por %p150, %p151
      %p154 = scmp.ne.s32.totalorder %s139, %s153
      %p155 = scmp.eq.s32.totalorder %s24, 0
      %p156 = por %p154, %p155
      %s158 = sadd.s32 %s157, 1
      %p161 = scmp.eq.s32.totalorder %s18, 1
      %p162 = scmp.ne.s32.totalorder %s157, %s159
      %p163 = scmp.eq.s32.totalorder %s18, 0
      %p164 = por %p162, %p163
      %p165 = scmp.ne.s32.totalorder %s157, %s159
      %p166 = scmp.eq.s32.totalorder %s23, 1
      %p167 = por %p165, %p166
      %p168 = scmp.ne.s32.totalorder %s159, %s160
      %p169 = scmp.eq.s32.totalorder %s23, 0
      %p170 = por %p168, %p169
      %p171 = scmp.ne.s32.totalorder %s159, %s160
      %p172 = scmp.eq.s32.totalorder %s24, 1
      %p173 = por %p171, %p172
      %p175 = scmp.ne.s32.totalorder %s160, %s174
      %p176 = scmp.eq.s32.totalorder %s24, 0
      %p177 = por %p175, %p176
      %s179 = sadd.s32 %s178, 1
      %p182 = scmp.eq.s32.totalorder %s18, 1
      %p183 = scmp.ne.s32.totalorder %s178, %s180
      %p184 = scmp.eq.s32.totalorder %s18, 0
      %p185 = por %p183, %p184
      %p186 = scmp.ne.s32.totalorder %s178, %s180
      %p187 = scmp.eq.s32.totalorder %s23, 1
      %p188 = por %p186, %p187
      %p189 = scmp.ne.s32.totalorder %s180, %s181
      %p190 = scmp.eq.s32.totalorder %s23, 0
      %p191 = por %p189, %p190
      %p192 = scmp.ne.s32.totalorder %s180, %s181
      %p193 = scmp.eq.s32.totalorder %s24, 1
      %p194 = por %p192, %p193
      %p196 = scmp.ne.s32.totalorder %s181, %s195
      %p197 = scmp.eq.s32.totalorder %s24, 0
      %p198 = por %p196, %p197
      %s200 = sadd.s32 %s199, 1
      %p203 = scmp.eq.s32.totalorder %s18, 1
      %p204 = scmp.ne.s32.totalorder %s199, %s201
      %p205 = scmp.eq.s32.totalorder %s18, 0
      %p206 = por %p204, %p205
      %p207 = scmp.ne.s32.totalorder %s199, %s201
      %p208 = scmp.eq.s32.totalorder %s23, 1
      %p209 = por %p207, %p208
      %p210 = scmp.ne.s32.totalorder %s201, %s202
      %p211 = scmp.eq.s32.totalorder %s23, 0
      %p212 = por %p210, %p211
      %p213 = scmp.ne.s32.totalorder %s201, %s202
      %p214 = scmp.eq.s32.totalorder %s24, 1
      %p215 = por %p213, %p214
      %p217 = scmp.ne.s32.totalorder %s202, %s216
      %p218 = scmp.eq.s32.totalorder %s24, 0
      %p219 = por %p217, %p218
      %s220 = ssub.s32 %s18, %s25
      %p221 = scmp.eq.s32.totalorder %s220, 0
      %s223 = sadd.s32 %s222, 1
      %s224 = scalar_select %p221, %s222, %s223
      %p227 = pneg %p221
      %p228 = scmp.eq.s32.totalorder %s18, 1
      %p229 = por %p227, %p228
      %p230 = scmp.ne.s32.totalorder %s222, %s225
      %p231 = scmp.eq.s32.totalorder %s18, 0
      %p232 = por %p230, %p231
      %p233 = scmp.ne.s32.totalorder %s222, %s225
      %p234 = scmp.eq.s32.totalorder %s23, 1
      %p235 = por %p233, %p234
      %p236 = scmp.ne.s32.totalorder %s225, %s226
      %p237 = scmp.eq.s32.totalorder %s23, 0
      %p238 = por %p236, %p237
      %p239 = scmp.ne.s32.totalorder %s225, %s226
      %p240 = scmp.eq.s32.totalorder %s24, 1
      %p241 = por %p239, %p240
      %p243 = scmp.ne.s32.totalorder %s226, %s242
      %p244 = scmp.eq.s32.totalorder %s24, 0
      %p245 = por %p243, %p244
      %p246 = scmp.le.s32.totalorder 1, %s18
      %p247 = scmp.lt.s32.totalorder %s18, 3
      %p248 = pnand %p246, %p247
      %p249 = pneg %p248
      // Predicated region
      $region9: #{tpu_custom_call.1} parent=5 // pred_check
        _
      $region10: #{tpu_custom_call.1} parent=5 // pred_check_branch
        %251 = sbr.rel (%p248) target = $region12
      $region11: #{tpu_custom_call.1} parent=5 // pred_region
        %s252 = ssub.s32 %s18, 1
        // Predicated region
        $region13: #{tpu_custom_call.1} parent=11 // pred_check
          %p253 = pneg %p65
        $region14: #{tpu_custom_call.1} parent=11 // pred_check_branch
          %255 = sbr.rel (%p253) target = $region16
        $region15: #{tpu_custom_call.1} parent=11 // pred_region
          _
        $region16: #{tpu_custom_call.1} parent=11 // pred_fallthru
          _
        // Predicated region
        $region17: #{tpu_custom_call.1} parent=11 // pred_check
          %p256 = pneg %p86
        $region18: #{tpu_custom_call.1} parent=11 // pred_check_branch
          %258 = sbr.rel (%p256) target = $region20
        $region19: #{tpu_custom_call.1} parent=11 // pred_region
          _
        $region20: #{tpu_custom_call.1} parent=11 // pred_fallthru
          _
        // Predicated region
        $region21: #{tpu_custom_call.1} parent=11 // pred_check
          %p259 = pneg %p107
        $region22: #{tpu_custom_call.1} parent=11 // pred_check_branch
          %261 = sbr.rel (%p259) target = $region24
        $region23: #{tpu_custom_call.1} parent=11 // pred_region
          _
        $region24: #{tpu_custom_call.1} parent=11 // pred_fallthru
          _
        // Predicated region
        $region25: #{tpu_custom_call.1} parent=11 // pred_check
          %p262 = pneg %p128
        $region26: #{tpu_custom_call.1} parent=11 // pred_check_branch
          %264 = sbr.rel (%p262) target = $region28
        $region27: #{tpu_custom_call.1} parent=11 // pred_region
          _
        $region28: #{tpu_custom_call.1} parent=11 // pred_fallthru
          _
        // Predicated region
        $region29: #{tpu_custom_call.1} parent=11 // pred_check
          %p265 = pneg %p149
        $region30: #{tpu_custom_call.1} parent=11 // pred_check_branch
          %267 = sbr.rel (%p265) target = $region32
        $region31: #{tpu_custom_call.1} parent=11 // pred_region
          _
        $region32: #{tpu_custom_call.1} parent=11 // pred_fallthru
          _
        // Predicated region
        $region33: #{tpu_custom_call.1} parent=11 // pred_check
          %p268 = pneg %p170
        $region34: #{tpu_custom_call.1} parent=11 // pred_check_branch
          %270 = sbr.rel (%p268) target = $region36
        $region35: #{tpu_custom_call.1} parent=11 // pred_region
          _
        $region36: #{tpu_custom_call.1} parent=11 // pred_fallthru
          _
        // Predicated region
        $region37: #{tpu_custom_call.1} parent=11 // pred_check
          %p271 = pneg %p191
        $region38: #{tpu_custom_call.1} parent=11 // pred_check_branch
          %273 = sbr.rel (%p271) target = $region40
        $region39: #{tpu_custom_call.1} parent=11 // pred_region
          _
        $region40: #{tpu_custom_call.1} parent=11 // pred_fallthru
          _
        // Predicated region
        $region41: #{tpu_custom_call.1} parent=11 // pred_check
          %p274 = pneg %p212
        $region42: #{tpu_custom_call.1} parent=11 // pred_check_branch
          %276 = sbr.rel (%p274) target = $region44
        $region43: #{tpu_custom_call.1} parent=11 // pred_region
          _
        $region44: #{tpu_custom_call.1} parent=11 // pred_fallthru
          _
      $region12: #{tpu_custom_call.1} parent=5 // pred_fallthru
        _
      %p277 = scmp.lt.s32.totalorder %s18, 2
      // Predicated region
      $region45: #{tpu_custom_call.1} parent=5 // pred_check
        %p278 = pneg %p277
      $region46: #{tpu_custom_call.1} parent=5 // pred_check_branch
        %280 = sbr.rel (%p278) target = $region48
      $region47: #{tpu_custom_call.1} parent=5 // pred_region
        // Predicated region
        $region49: #{tpu_custom_call.1} parent=47 // pred_check
          %p281 = pneg %p38
        $region50: #{tpu_custom_call.1} parent=47 // pred_check_branch
          %283 = sbr.rel (%p281) target = $region52
        $region51: #{tpu_custom_call.1} parent=47 // pred_region
          %p284 = scmp.lt.s32.totalorder %s18, 1
          %s285 = scalar_select %p284, %s18, 1
          %s286 = smul.addr %s285, 8
          %s287 = scalar_lea.vmem %s0, %s286
        $region52: #{tpu_custom_call.1} parent=47 // pred_fallthru
          _
      $region48: #{tpu_custom_call.1} parent=5 // pred_fallthru
        _
      %p288 = scmp.le.s32.totalorder 1, %s18
      %p289 = scmp.lt.s32.totalorder %s18, 3
      %p290 = pnand %p288, %p289
      %p291 = pneg %p290
      // Predicated region
      $region53: #{tpu_custom_call.1} parent=5 // pred_check
        _
      $region54: #{tpu_custom_call.1} parent=5 // pred_check_branch
        %293 = sbr.rel (%p290) target = $region56
      $region55: #{tpu_custom_call.1} parent=5 // pred_region
        %s294 = ssub.s32 %s18, 1
        %p295 = scmp.lt.s32.totalorder %s23, 1
        %s296 = scalar_select %p295, %s23, 1
        %s297 = smul.addr %s296, 8
        %s298 = scalar_lea.vmem %s0, %s297
        %p299 = pneg %p44
        %p300 = pneg %p41
        %p301 = pneg %p65
        %p302 = pneg %p62
        %p303 = pneg %p86
        %p304 = pneg %p83
        %p305 = pneg %p107
        %p306 = pneg %p104
        %p307 = pneg %p128
        %p308 = pneg %p125
        %p309 = pneg %p149
        %p310 = pneg %p146
        %p311 = pneg %p170
        %p312 = pneg %p167
        %p313 = pneg %p191
        %p314 = pneg %p188
        %p315 = pneg %p212
        %p316 = pneg %p209
        %p317 = pneg %p238
        %p318 = pneg %p235
        %s319 = sand.u32 %s225, 1
        %s320 = scalar_lea.sflag [#allocation3], %s319
        %s321 = sand.u32 %s225, 1
        %s322 = smul.addr %s321, 8
        %s323 = scalar_lea.vmem [#allocation2], %s322
        %p324 = scmp.lt.s32.totalorder %s23, 1
        %s325 = scalar_select %p324, %s23, 1
        %s326 = smul.addr %s325, 8
        %s327 = scalar_lea.vmem %s0, %s326
        %v328 = vld [vmem:[%s327] sm:$0xff]
        %v329 = vld [vmem:[%s8] sm:$0x1]
        %v331 = vlaneseq
        %v332 = vshrl.u32 %v331, 7
        %v333 = vsub.s32 0, %v332
        %v334 = vrot.slane %v329, %v333
        %v336 = vld [vmem:[%s1] sm:$0xff]
        %v337 = vld [vmem:[%s1 + $0x8] sm:$0xff]
        %v338 = vld [vmem:[%s1 + $0x10] sm:$0xff]
        %v339 = vld [vmem:[%s1 + $0x18] sm:$0xff]
        %v340 = vld [vmem:[%s4] sm:$0x1]
        %v342 = vlaneseq
        %v343 = vshrl.u32 %v342, 7
        %v344 = vsub.s32 0, %v343
        %v345 = vrot.slane %v340, %v344
        %vm347 = vcmask 261120
        %v349 = vsel %vm347, %v328, 0
        %351 = vmatprep.subr.mxu0 0.0
        %352 = vmatpush1.msra.mxu0 0.0
        %353 = vmatprep.subr.mxu0 0.0
        %354 = vmatpush1.msra.mxu0 0.0
        %355 = vmatprep.subr.mxu0 0.0
        %356 = vmatpush1.msra.mxu0 0.0
        %357 = vmatprep.subr.mxu0 0.0
        %358 = vmatpush1.msra.mxu0 0.0
        %359 = vmatprep.subr.mxu0 0.0
        %360 = vmatpush1.msra.mxu0 0.0
        %361 = vmatprep.subr.mxu0 0.0
        %362 = vmatpush1.msra.mxu0 0.0
        %363 = vmatprep.subr.mxu0 0.0
        %364 = vmatpush1.msra.mxu0 0.0
        %365 = vmatprep.subr.mxu0 0.0
        %366 = vmatpush1.msra.mxu0 0.0
        %367 = vmatprep.subr.mxu0 0.0
        %368 = vmatpush1.msra.mxu0 0.0
        %369 = vmatprep.subr.mxu0 0.0
        %370 = vmatpush1.msra.mxu0 0.0
        %371 = vmatprep.subr.mxu0 0.0
        %372 = vmatpush1.msra.mxu0 0.0
        %373 = vmatprep.subr.mxu0 0.0
        %374 = vmatpush1.msra.mxu0 0.0
        %375 = vmatprep.subr.mxu0 0.0
        %376 = vmatpush1.msra.mxu0 %v339
        %377 = vmatprep.subr.mxu0 0.0
        %378 = vmatpush1.msra.mxu0 %v338
        %379 = vmatprep.subr.mxu0 0.0
        %380 = vmatpush1.msra.mxu0 %v337
        %381 = vmatprep.subr.mxu0 0.0
        %382 = vmatpush1.msra.mxu0 %v336
        %383 = vmatprep.subr.mxu0 0.0
        %384 = vmatpush2.msra.mxu0 0.0
        %385 = vmatprep.subr.mxu0 0.0
        %386 = vmatpush2.msra.mxu0 0.0
        %387 = vmatprep.subr.mxu0 0.0
        %388 = vmatpush2.msra.mxu0 0.0
        %389 = vmatprep.subr.mxu0 0.0
        %390 = vmatpush2.msra.mxu0 0.0
        %391 = vmatprep.subr.mxu0 0.0
        %392 = vmatpush2.msra.mxu0 0.0
        %393 = vmatprep.subr.mxu0 0.0
        %394 = vmatpush2.msra.mxu0 0.0
        %395 = vmatprep.subr.mxu0 0.0
        %396 = vmatpush2.msra.mxu0 0.0
        %397 = vmatprep.subr.mxu0 0.0
        %398 = vmatpush2.msra.mxu0 0.0
        %399 = vmatprep.subr.mxu0 0.0
        %400 = vmatpush2.msra.mxu0 0.0
        %401 = vmatprep.subr.mxu0 0.0
        %402 = vmatpush2.msra.mxu0 0.0
        %403 = vmatprep.subr.mxu0 0.0
        %404 = vmatpush2.msra.mxu0 0.0
        %405 = vmatprep.subr.mxu0 0.0
        %406 = vmatpush2.msra.mxu0 0.0
        %407 = vmatprep.subr.mxu0 0.0
        %408 = vmatpush2.msra.mxu0 0.0
        %409 = vmatprep.subr.mxu0 0.0
        %410 = vmatpush2.msra.mxu0 0.0
        %411 = vmatprep.subr.mxu0 0.0
        %412 = vmatpush2.msra.mxu0 0.0
        %413 = vmatprep.subr.mxu0 0.0
        %414 = vmatpush2.msra.mxu0 0.0
        %415 = vmatprep.mubr.f32.mxu0 0.0
        %416 = vmatmul.mubr.f32.gmra.mxu0 %v349
        %v417 = vpop.f32.mrf.mxu0
        %v418 = vadd.f32 %v345, %v417
        %v419 = vpop.f32.mrf.mxu0
        %420 = vdwg.mxu0
        %v421 = vld [vmem:[%s2] sm:$0xff]
        %v422 = vld [vmem:[%s2 + $0x8] sm:$0xff]
        %v423 = vld [vmem:[%s2 + $0x10] sm:$0xff]
        %v424 = vld [vmem:[%s2 + $0x18] sm:$0xff]
        %v425 = vld [vmem:[%s5] sm:$0x1]
        %v427 = vlaneseq
        %v428 = vshrl.u32 %v427, 7
        %v429 = vsub.s32 0, %v428
        %v430 = vrot.slane %v425, %v429
        %432 = vmatprep.subr.mxu0 0.0
        %433 = vmatpush1.msra.mxu0 0.0
        %434 = vmatprep.subr.mxu0 0.0
        %435 = vmatpush1.msra.mxu0 0.0
        %436 = vmatprep.subr.mxu0 0.0
        %437 = vmatpush1.msra.mxu0 0.0
        %438 = vmatprep.subr.mxu0 0.0
        %439 = vmatpush1.msra.mxu0 0.0
        %440 = vmatprep.subr.mxu0 0.0
        %441 = vmatpush1.msra.mxu0 0.0
        %442 = vmatprep.subr.mxu0 0.0
        %443 = vmatpush1.msra.mxu0 0.0
        %444 = vmatprep.subr.mxu0 0.0
        %445 = vmatpush1.msra.mxu0 0.0
        %446 = vmatprep.subr.mxu0 0.0
        %447 = vmatpush1.msra.mxu0 0.0
        %448 = vmatprep.subr.mxu0 0.0
        %449 = vmatpush1.msra.mxu0 0.0
        %450 = vmatprep.subr.mxu0 0.0
        %451 = vmatpush1.msra.mxu0 0.0
        %452 = vmatprep.subr.mxu0 0.0
        %453 = vmatpush1.msra.mxu0 0.0
        %454 = vmatprep.subr.mxu0 0.0
        %455 = vmatpush1.msra.mxu0 0.0
        %456 = vmatprep.subr.mxu0 0.0
        %457 = vmatpush1.msra.mxu0 %v424
        %458 = vmatprep.subr.mxu0 0.0
        %459 = vmatpush1.msra.mxu0 %v423
        %460 = vmatprep.subr.mxu0 0.0
        %461 = vmatpush1.msra.mxu0 %v422
        %462 = vmatprep.subr.mxu0 0.0
        %463 = vmatpush1.msra.mxu0 %v421
        %464 = vmatprep.subr.mxu0 0.0
        %465 = vmatpush2.msra.mxu0 0.0
        %466 = vmatprep.subr.mxu0 0.0
        %467 = vmatpush2.msra.mxu0 0.0
        %468 = vmatprep.subr.mxu0 0.0
        %469 = vmatpush2.msra.mxu0 0.0
        %470 = vmatprep.subr.mxu0 0.0
        %471 = vmatpush2.msra.mxu0 0.0
        %472 = vmatprep.subr.mxu0 0.0
        %473 = vmatpush2.msra.mxu0 0.0
        %474 = vmatprep.subr.mxu0 0.0
        %475 = vmatpush2.msra.mxu0 0.0
        %476 = vmatprep.subr.mxu0 0.0
        %477 = vmatpush2.msra.mxu0 0.0
        %478 = vmatprep.subr.mxu0 0.0
        %479 = vmatpush2.msra.mxu0 0.0
        %480 = vmatprep.subr.mxu0 0.0
        %481 = vmatpush2.msra.mxu0 0.0
        %482 = vmatprep.subr.mxu0 0.0
        %483 = vmatpush2.msra.mxu0 0.0
        %484 = vmatprep.subr.mxu0 0.0
        %485 = vmatpush2.msra.mxu0 0.0
        %486 = vmatprep.subr.mxu0 0.0
        %487 = vmatpush2.msra.mxu0 0.0
        %488 = vmatprep.subr.mxu0 0.0
        %489 = vmatpush2.msra.mxu0 0.0
        %490 = vmatprep.subr.mxu0 0.0
        %491 = vmatpush2.msra.mxu0 0.0
        %492 = vmatprep.subr.mxu0 0.0
        %493 = vmatpush2.msra.mxu0 0.0
        %494 = vmatprep.subr.mxu0 0.0
        %495 = vmatpush2.msra.mxu0 0.0
        %496 = vmatprep.mubr.f32.mxu0 0.0
        %497 = vmatmul.mubr.f32.gmra.mxu0 %v349
        %v498 = vpop.f32.mrf.mxu0
        %v499 = vadd.f32 %v430, %v498
        %v500 = vpop.f32.mrf.mxu0
        %501 = vdwg.mxu0
        %v502 = vld [vmem:[%s3] sm:$0xff]
        %v503 = vld [vmem:[%s3 + $0x8] sm:$0xff]
        %v504 = vld [vmem:[%s3 + $0x10] sm:$0xff]
        %v505 = vld [vmem:[%s3 + $0x18] sm:$0xff]
        %v506 = vld [vmem:[%s6] sm:$0x1]
        %v508 = vlaneseq
        %v509 = vshrl.u32 %v508, 7
        %v510 = vsub.s32 0, %v509
        %v511 = vrot.slane %v506, %v510
        %513 = vmatprep.subr.mxu0 0.0
        %514 = vmatpush1.msra.mxu0 0.0
        %515 = vmatprep.subr.mxu0 0.0
        %516 = vmatpush1.msra.mxu0 0.0
        %517 = vmatprep.subr.mxu0 0.0
        %518 = vmatpush1.msra.mxu0 0.0
        %519 = vmatprep.subr.mxu0 0.0
        %520 = vmatpush1.msra.mxu0 0.0
        %521 = vmatprep.subr.mxu0 0.0
        %522 = vmatpush1.msra.mxu0 0.0
        %523 = vmatprep.subr.mxu0 0.0
        %524 = vmatpush1.msra.mxu0 0.0
        %525 = vmatprep.subr.mxu0 0.0
        %526 = vmatpush1.msra.mxu0 0.0
        %527 = vmatprep.subr.mxu0 0.0
        %528 = vmatpush1.msra.mxu0 0.0
        %529 = vmatprep.subr.mxu0 0.0
        %530 = vmatpush1.msra.mxu0 0.0
        %531 = vmatprep.subr.mxu0 0.0
        %532 = vmatpush1.msra.mxu0 0.0
        %533 = vmatprep.subr.mxu0 0.0
        %534 = vmatpush1.msra.mxu0 0.0
        %535 = vmatprep.subr.mxu0 0.0
        %536 = vmatpush1.msra.mxu0 0.0
        %537 = vmatprep.subr.mxu0 0.0
        %538 = vmatpush1.msra.mxu0 %v505
        %539 = vmatprep.subr.mxu0 0.0
        %540 = vmatpush1.msra.mxu0 %v504
        %541 = vmatprep.subr.mxu0 0.0
        %542 = vmatpush1.msra.mxu0 %v503
        %543 = vmatprep.subr.mxu0 0.0
        %544 = vmatpush1.msra.mxu0 %v502
        %545 = vmatprep.subr.mxu0 0.0
        %546 = vmatpush2.msra.mxu0 0.0
        %547 = vmatprep.subr.mxu0 0.0
        %548 = vmatpush2.msra.mxu0 0.0
        %549 = vmatprep.subr.mxu0 0.0
        %550 = vmatpush2.msra.mxu0 0.0
        %551 = vmatprep.subr.mxu0 0.0
        %552 = vmatpush2.msra.mxu0 0.0
        %553 = vmatprep.subr.mxu0 0.0
        %554 = vmatpush2.msra.mxu0 0.0
        %555 = vmatprep.subr.mxu0 0.0
        %556 = vmatpush2.msra.mxu0 0.0
        %557 = vmatprep.subr.mxu0 0.0
        %558 = vmatpush2.msra.mxu0 0.0
        %559 = vmatprep.subr.mxu0 0.0
        %560 = vmatpush2.msra.mxu0 0.0
        %561 = vmatprep.subr.mxu0 0.0
        %562 = vmatpush2.msra.mxu0 0.0
        %563 = vmatprep.subr.mxu0 0.0
        %564 = vmatpush2.msra.mxu0 0.0
        %565 = vmatprep.subr.mxu0 0.0
        %566 = vmatpush2.msra.mxu0 0.0
        %567 = vmatprep.subr.mxu0 0.0
        %568 = vmatpush2.msra.mxu0 0.0
        %569 = vmatprep.subr.mxu0 0.0
        %570 = vmatpush2.msra.mxu0 0.0
        %571 = vmatprep.subr.mxu0 0.0
        %572 = vmatpush2.msra.mxu0 0.0
        %573 = vmatprep.subr.mxu0 0.0
        %574 = vmatpush2.msra.mxu0 0.0
        %575 = vmatprep.subr.mxu0 0.0
        %576 = vmatpush2.msra.mxu0 0.0
        %577 = vmatprep.mubr.f32.mxu0 0.0
        %578 = vmatmul.mubr.f32.gmra.mxu0 %v349
        %v579 = vpop.f32.mrf.mxu0
        %v580 = vadd.f32 %v511, %v579
        %v581 = vpop.f32.mrf.mxu0
        %582 = vdwg.mxu0
        %vm583 = vcmask 64512
        %v585 = vsel %vm583, %v418, 0
        %v588 = vsel %vm583, %v499, 0
        %590 = vmatprep.subr.mxu0 0.0
        %591 = vmatpush1.xpose.msra.mxu0 0.0
        %592 = vmatprep.subr.mxu0 0.0
        %593 = vmatpush1.xpose.msra.mxu0 0.0
        %594 = vmatprep.subr.mxu0 0.0
        %595 = vmatpush1.xpose.msra.mxu0 0.0
        %596 = vmatprep.subr.mxu0 0.0
        %597 = vmatpush1.xpose.msra.mxu0 0.0
        %598 = vmatprep.subr.mxu0 0.0
        %599 = vmatpush1.xpose.msra.mxu0 0.0
        %600 = vmatprep.subr.mxu0 0.0
        %601 = vmatpush1.xpose.msra.mxu0 0.0
        %602 = vmatprep.subr.mxu0 0.0
        %603 = vmatpush1.xpose.msra.mxu0 0.0
        %604 = vmatprep.subr.mxu0 0.0
        %605 = vmatpush1.xpose.msra.mxu0 0.0
        %606 = vmatprep.subr.mxu0 0.0
        %607 = vmatpush1.xpose.msra.mxu0 0.0
        %608 = vmatprep.subr.mxu0 0.0
        %609 = vmatpush1.xpose.msra.mxu0 0.0
        %610 = vmatprep.subr.mxu0 0.0
        %611 = vmatpush1.xpose.msra.mxu0 0.0
        %612 = vmatprep.subr.mxu0 0.0
        %613 = vmatpush1.xpose.msra.mxu0 0.0
        %614 = vmatprep.subr.mxu0 0.0
        %615 = vmatpush1.xpose.msra.mxu0 0.0
        %616 = vmatprep.subr.mxu0 0.0
        %617 = vmatpush1.xpose.msra.mxu0 0.0
        %618 = vmatprep.subr.mxu0 0.0
        %619 = vmatpush1.xpose.msra.mxu0 0.0
        %620 = vmatprep.subr.mxu0 0.0
        %621 = vmatpush1.xpose.msra.mxu0 %v588
        %622 = vmatprep.subr.mxu0 0.0
        %623 = vmatpush2.xpose.msra.mxu0 0.0
        %624 = vmatprep.subr.mxu0 0.0
        %625 = vmatpush2.xpose.msra.mxu0 0.0
        %626 = vmatprep.subr.mxu0 0.0
        %627 = vmatpush2.xpose.msra.mxu0 0.0
        %628 = vmatprep.subr.mxu0 0.0
        %629 = vmatpush2.xpose.msra.mxu0 0.0
        %630 = vmatprep.subr.mxu0 0.0
        %631 = vmatpush2.xpose.msra.mxu0 0.0
        %632 = vmatprep.subr.mxu0 0.0
        %633 = vmatpush2.xpose.msra.mxu0 0.0
        %634 = vmatprep.subr.mxu0 0.0
        %635 = vmatpush2.xpose.msra.mxu0 0.0
        %636 = vmatprep.subr.mxu0 0.0
        %637 = vmatpush2.xpose.msra.mxu0 0.0
        %638 = vmatprep.subr.mxu0 0.0
        %639 = vmatpush2.xpose.msra.mxu0 0.0
        %640 = vmatprep.subr.mxu0 0.0
        %641 = vmatpush2.xpose.msra.mxu0 0.0
        %642 = vmatprep.subr.mxu0 0.0
        %643 = vmatpush2.xpose.msra.mxu0 0.0
        %644 = vmatprep.subr.mxu0 0.0
        %645 = vmatpush2.xpose.msra.mxu0 0.0
        %646 = vmatprep.subr.mxu0 0.0
        %647 = vmatpush2.xpose.msra.mxu0 0.0
        %648 = vmatprep.subr.mxu0 0.0
        %649 = vmatpush2.xpose.msra.mxu0 0.0
        %650 = vmatprep.subr.mxu0 0.0
        %651 = vmatpush2.xpose.msra.mxu0 0.0
        %652 = vmatprep.subr.mxu0 0.0
        %653 = vmatpush2.xpose.msra.mxu0 0.0
        %654 = vmatprep.mubr.f32.mxu0 0.0
        %655 = vmatmul.mubr.f32.gmra.mxu0 %v585
        %v656 = vpop.f32.mrf.mxu0
        %v657 = vadd.f32 0.0, %v656
        %v658 = vpop.f32.mrf.mxu0
        %659 = vdwg.mxu0
        %v660 = vsel %vm583, %v657, -inf
        %661 = vmax.xlane.f32.xlu0 %v660
        %v662 = vpop.xlane.xlu0 %661
        %v663 = vsub.f32 %v657, %v662
        %v664 = vmul.f32 %v663, 1.442695
        %v665 = vpow.pop %v664
        %v666 = vsel %vm583, %v665, 0.0
        %667 = vadd.xlane.f32.xlu0 %v666
        %v668 = vpop.xlane.xlu0 %667
        %v669 = vrcp.pop %v668
        %v670 = vmul.f32 %v665, %v669
        %v672 = vsel %vm583, %v670, 0
        %674 = vmatprep.subr.mxu0 0.0
        %675 = vmatpush1.msra.mxu0 0.0
        %676 = vmatprep.subr.mxu0 0.0
        %677 = vmatpush1.msra.mxu0 0.0
        %678 = vmatprep.subr.mxu0 0.0
        %679 = vmatpush1.msra.mxu0 0.0
        %680 = vmatprep.subr.mxu0 0.0
        %681 = vmatpush1.msra.mxu0 0.0
        %682 = vmatprep.subr.mxu0 0.0
        %683 = vmatpush1.msra.mxu0 0.0
        %684 = vmatprep.subr.mxu0 0.0
        %685 = vmatpush1.msra.mxu0 0.0
        %686 = vmatprep.subr.mxu0 0.0
        %687 = vmatpush1.msra.mxu0 0.0
        %688 = vmatprep.subr.mxu0 0.0
        %689 = vmatpush1.msra.mxu0 0.0
        %690 = vmatprep.subr.mxu0 0.0
        %691 = vmatpush1.msra.mxu0 0.0
        %692 = vmatprep.subr.mxu0 0.0
        %693 = vmatpush1.msra.mxu0 0.0
        %694 = vmatprep.subr.mxu0 0.0
        %695 = vmatpush1.msra.mxu0 0.0
        %696 = vmatprep.subr.mxu0 0.0
        %697 = vmatpush1.msra.mxu0 0.0
        %698 = vmatprep.subr.mxu0 0.0
        %699 = vmatpush1.msra.mxu0 0.0
        %700 = vmatprep.subr.mxu0 0.0
        %701 = vmatpush1.msra.mxu0 0.0
        %702 = vmatprep.subr.mxu0 0.0
        %703 = vmatpush1.msra.mxu0 0.0
        %704 = vmatprep.subr.mxu0 0.0
        %705 = vmatpush1.msra.mxu0 %v580
        %706 = vmatprep.subr.mxu0 0.0
        %707 = vmatpush2.msra.mxu0 0.0
        %708 = vmatprep.subr.mxu0 0.0
        %709 = vmatpush2.msra.mxu0 0.0
        %710 = vmatprep.subr.mxu0 0.0
        %711 = vmatpush2.msra.mxu0 0.0
        %712 = vmatprep.subr.mxu0 0.0
        %713 = vmatpush2.msra.mxu0 0.0
        %714 = vmatprep.subr.mxu0 0.0
        %715 = vmatpush2.msra.mxu0 0.0
        %716 = vmatprep.subr.mxu0 0.0
        %717 = vmatpush2.msra.mxu0 0.0
        %718 = vmatprep.subr.mxu0 0.0
        %719 = vmatpush2.msra.mxu0 0.0
        %720 = vmatprep.subr.mxu0 0.0
        %721 = vmatpush2.msra.mxu0 0.0
        %722 = vmatprep.subr.mxu0 0.0
        %723 = vmatpush2.msra.mxu0 0.0
        %724 = vmatprep.subr.mxu0 0.0
        %725 = vmatpush2.msra.mxu0 0.0
        %726 = vmatprep.subr.mxu0 0.0
        %727 = vmatpush2.msra.mxu0 0.0
        %728 = vmatprep.subr.mxu0 0.0
        %729 = vmatpush2.msra.mxu0 0.0
        %730 = vmatprep.subr.mxu0 0.0
        %731 = vmatpush2.msra.mxu0 0.0
        %732 = vmatprep.subr.mxu0 0.0
        %733 = vmatpush2.msra.mxu0 0.0
        %734 = vmatprep.subr.mxu0 0.0
        %735 = vmatpush2.msra.mxu0 0.0
        %736 = vmatprep.subr.mxu0 0.0
        %737 = vmatpush2.msra.mxu0 0.0
        %738 = vmatprep.mubr.f32.mxu0 0.0
        %739 = vmatmul.mubr.f32.gmra.mxu0 %v672
        %v740 = vpop.f32.mrf.mxu0
        %v741 = vadd.f32 0.0, %v740
        %v742 = vpop.f32.mrf.mxu0
        %743 = vdwg.mxu0
        %v744 = vld [vmem:[%s7] sm:$0xff]
        %v746 = vsel %vm583, %v741, 0
        %748 = vmatprep.subr.mxu0 0.0
        %749 = vmatpush1.msra.mxu0 0.0
        %750 = vmatprep.subr.mxu0 0.0
        %751 = vmatpush1.msra.mxu0 0.0
        %752 = vmatprep.subr.mxu0 0.0
        %753 = vmatpush1.msra.mxu0 0.0
        %754 = vmatprep.subr.mxu0 0.0
        %755 = vmatpush1.msra.mxu0 0.0
        %756 = vmatprep.subr.mxu0 0.0
        %757 = vmatpush1.msra.mxu0 0.0
        %758 = vmatprep.subr.mxu0 0.0
        %759 = vmatpush1.msra.mxu0 0.0
        %760 = vmatprep.subr.mxu0 0.0
        %761 = vmatpush1.msra.mxu0 0.0
        %762 = vmatprep.subr.mxu0 0.0
        %763 = vmatpush1.msra.mxu0 0.0
        %764 = vmatprep.subr.mxu0 0.0
        %765 = vmatpush1.msra.mxu0 0.0
        %766 = vmatprep.subr.mxu0 0.0
        %767 = vmatpush1.msra.mxu0 0.0
        %768 = vmatprep.subr.mxu0 0.0
        %769 = vmatpush1.msra.mxu0 0.0
        %770 = vmatprep.subr.mxu0 0.0
        %771 = vmatpush1.msra.mxu0 0.0
        %772 = vmatprep.subr.mxu0 0.0
        %773 = vmatpush1.msra.mxu0 0.0
        %774 = vmatprep.subr.mxu0 0.0
        %775 = vmatpush1.msra.mxu0 0.0
        %776 = vmatprep.subr.mxu0 0.0
        %777 = vmatpush1.msra.mxu0 0.0
        %778 = vmatprep.subr.mxu0 0.0
        %779 = vmatpush1.msra.mxu0 %v744
        %780 = vmatprep.subr.mxu0 0.0
        %781 = vmatpush2.msra.mxu0 0.0
        %782 = vmatprep.subr.mxu0 0.0
        %783 = vmatpush2.msra.mxu0 0.0
        %784 = vmatprep.subr.mxu0 0.0
        %785 = vmatpush2.msra.mxu0 0.0
        %786 = vmatprep.subr.mxu0 0.0
        %787 = vmatpush2.msra.mxu0 0.0
        %788 = vmatprep.subr.mxu0 0.0
        %789 = vmatpush2.msra.mxu0 0.0
        %790 = vmatprep.subr.mxu0 0.0
        %791 = vmatpush2.msra.mxu0 0.0
        %792 = vmatprep.subr.mxu0 0.0
        %793 = vmatpush2.msra.mxu0 0.0
        %794 = vmatprep.subr.mxu0 0.0
        %795 = vmatpush2.msra.mxu0 0.0
        %796 = vmatprep.subr.mxu0 0.0
        %797 = vmatpush2.msra.mxu0 0.0
        %798 = vmatprep.subr.mxu0 0.0
        %799 = vmatpush2.msra.mxu0 0.0
        %800 = vmatprep.subr.mxu0 0.0
        %801 = vmatpush2.msra.mxu0 0.0
        %802 = vmatprep.subr.mxu0 0.0
        %803 = vmatpush2.msra.mxu0 0.0
        %804 = vmatprep.subr.mxu0 0.0
        %805 = vmatpush2.msra.mxu0 0.0
        %806 = vmatprep.subr.mxu0 0.0
        %807 = vmatpush2.msra.mxu0 0.0
        %808 = vmatprep.subr.mxu0 0.0
        %809 = vmatpush2.msra.mxu0 0.0
        %810 = vmatprep.subr.mxu0 0.0
        %811 = vmatpush2.msra.mxu0 0.0
        %812 = vmatprep.mubr.f32.mxu0 0.0
        %813 = vmatmul.mubr.f32.gmra.mxu0 %v746
        %v814 = vpop.f32.mrf.mxu0
        %v815 = vadd.f32 0.0, %v814
        %v816 = vpop.f32.mrf.mxu0
        %817 = vdwg.mxu0
        %v818 = vadd.f32 %v334, %v815
        %s819 = scalar_lea.vmem %s1, 32
        %v820 = vld [vmem:[%s819] sm:$0xff]
        %v821 = vld [vmem:[%s819 + $0x8] sm:$0xff]
        %v822 = vld [vmem:[%s819 + $0x10] sm:$0xff]
        %v823 = vld [vmem:[%s819 + $0x18] sm:$0xff]
        %s824 = scalar_lea.vmem %s4, 1
        %v825 = vld [vmem:[%s824] sm:$0x1]
        %v827 = vlaneseq
        %v828 = vshrl.u32 %v827, 7
        %v829 = vsub.s32 0, %v828
        %v830 = vrot.slane %v825, %v829
        %832 = vmatprep.subr.mxu0 0.0
        %833 = vmatpush1.msra.mxu0 0.0
        %834 = vmatprep.subr.mxu0 0.0
        %835 = vmatpush1.msra.mxu0 0.0
        %836 = vmatprep.subr.mxu0 0.0
        %837 = vmatpush1.msra.mxu0 0.0
        %838 = vmatprep.subr.mxu0 0.0
        %839 = vmatpush1.msra.mxu0 0.0
        %840 = vmatprep.subr.mxu0 0.0
        %841 = vmatpush1.msra.mxu0 0.0
        %842 = vmatprep.subr.mxu0 0.0
        %843 = vmatpush1.msra.mxu0 0.0
        %844 = vmatprep.subr.mxu0 0.0
        %845 = vmatpush1.msra.mxu0 0.0
        %846 = vmatprep.subr.mxu0 0.0
        %847 = vmatpush1.msra.mxu0 0.0
        %848 = vmatprep.subr.mxu0 0.0
        %849 = vmatpush1.msra.mxu0 0.0
        %850 = vmatprep.subr.mxu0 0.0
        %851 = vmatpush1.msra.mxu0 0.0
        %852 = vmatprep.subr.mxu0 0.0
        %853 = vmatpush1.msra.mxu0 0.0
        %854 = vmatprep.subr.mxu0 0.0
        %855 = vmatpush1.msra.mxu0 0.0
        %856 = vmatprep.subr.mxu0 0.0
        %857 = vmatpush1.msra.mxu0 %v823
        %858 = vmatprep.subr.mxu0 0.0
        %859 = vmatpush1.msra.mxu0 %v822
        %860 = vmatprep.subr.mxu0 0.0
        %861 = vmatpush1.msra.mxu0 %v821
        %862 = vmatprep.subr.mxu0 0.0
        %863 = vmatpush1.msra.mxu0 %v820
        %864 = vmatprep.subr.mxu0 0.0
        %865 = vmatpush2.msra.mxu0 0.0
        %866 = vmatprep.subr.mxu0 0.0
        %867 = vmatpush2.msra.mxu0 0.0
        %868 = vmatprep.subr.mxu0 0.0
        %869 = vmatpush2.msra.mxu0 0.0
        %870 = vmatprep.subr.mxu0 0.0
        %871 = vmatpush2.msra.mxu0 0.0
        %872 = vmatprep.subr.mxu0 0.0
        %873 = vmatpush2.msra.mxu0 0.0
        %874 = vmatprep.subr.mxu0 0.0
        %875 = vmatpush2.msra.mxu0 0.0
        %876 = vmatprep.subr.mxu0 0.0
        %877 = vmatpush2.msra.mxu0 0.0
        %878 = vmatprep.subr.mxu0 0.0
        %879 = vmatpush2.msra.mxu0 0.0
        %880 = vmatprep.subr.mxu0 0.0
        %881 = vmatpush2.msra.mxu0 0.0
        %882 = vmatprep.subr.mxu0 0.0
        %883 = vmatpush2.msra.mxu0 0.0
        %884 = vmatprep.subr.mxu0 0.0
        %885 = vmatpush2.msra.mxu0 0.0
        %886 = vmatprep.subr.mxu0 0.0
        %887 = vmatpush2.msra.mxu0 0.0
        %888 = vmatprep.subr.mxu0 0.0
        %889 = vmatpush2.msra.mxu0 0.0
        %890 = vmatprep.subr.mxu0 0.0
        %891 = vmatpush2.msra.mxu0 0.0
        %892 = vmatprep.subr.mxu0 0.0
        %893 = vmatpush2.msra.mxu0 0.0
        %894 = vmatprep.subr.mxu0 0.0
        %895 = vmatpush2.msra.mxu0 0.0
        %896 = vmatprep.mubr.f32.mxu0 0.0
        %897 = vmatmul.mubr.f32.gmra.mxu0 %v349
        %v898 = vpop.f32.mrf.mxu0
        %v899 = vadd.f32 %v830, %v898
        %v900 = vpop.f32.mrf.mxu0
        %901 = vdwg.mxu0
        %s902 = scalar_lea.vmem %s2, 32
        %v903 = vld [vmem:[%s902] sm:$0xff]
        %v904 = vld [vmem:[%s902 + $0x8] sm:$0xff]
        %v905 = vld [vmem:[%s902 + $0x10] sm:$0xff]
        %v906 = vld [vmem:[%s902 + $0x18] sm:$0xff]
        %s907 = scalar_lea.vmem %s5, 1
        %v908 = vld [vmem:[%s907] sm:$0x1]
        %v910 = vlaneseq
        %v911 = vshrl.u32 %v910, 7
        %v912 = vsub.s32 0, %v911
        %v913 = vrot.slane %v908, %v912
        %915 = vmatprep.subr.mxu0 0.0
        %916 = vmatpush1.msra.mxu0 0.0
        %917 = vmatprep.subr.mxu0 0.0
        %918 = vmatpush1.msra.mxu0 0.0
        %919 = vmatprep.subr.mxu0 0.0
        %920 = vmatpush1.msra.mxu0 0.0
        %921 = vmatprep.subr.mxu0 0.0
        %922 = vmatpush1.msra.mxu0 0.0
        %923 = vmatprep.subr.mxu0 0.0
        %924 = vmatpush1.msra.mxu0 0.0
        %925 = vmatprep.subr.mxu0 0.0
        %926 = vmatpush1.msra.mxu0 0.0
        %927 = vmatprep.subr.mxu0 0.0
        %928 = vmatpush1.msra.mxu0 0.0
        %929 = vmatprep.subr.mxu0 0.0
        %930 = vmatpush1.msra.mxu0 0.0
        %931 = vmatprep.subr.mxu0 0.0
        %932 = vmatpush1.msra.mxu0 0.0
        %933 = vmatprep.subr.mxu0 0.0
        %934 = vmatpush1.msra.mxu0 0.0
        %935 = vmatprep.subr.mxu0 0.0
        %936 = vmatpush1.msra.mxu0 0.0
        %937 = vmatprep.subr.mxu0 0.0
        %938 = vmatpush1.msra.mxu0 0.0
        %939 = vmatprep.subr.mxu0 0.0
        %940 = vmatpush1.msra.mxu0 %v906
        %941 = vmatprep.subr.mxu0 0.0
        %942 = vmatpush1.msra.mxu0 %v905
        %943 = vmatprep.subr.mxu0 0.0
        %944 = vmatpush1.msra.mxu0 %v904
        %945 = vmatprep.subr.mxu0 0.0
        %946 = vmatpush1.msra.mxu0 %v903
        %947 = vmatprep.subr.mxu0 0.0
        %948 = vmatpush2.msra.mxu0 0.0
        %949 = vmatprep.subr.mxu0 0.0
        %950 = vmatpush2.msra.mxu0 0.0
        %951 = vmatprep.subr.mxu0 0.0
        %952 = vmatpush2.msra.mxu0 0.0
        %953 = vmatprep.subr.mxu0 0.0
        %954 = vmatpush2.msra.mxu0 0.0
        %955 = vmatprep.subr.mxu0 0.0
        %956 = vmatpush2.msra.mxu0 0.0
        %957 = vmatprep.subr.mxu0 0.0
        %958 = vmatpush2.msra.mxu0 0.0
        %959 = vmatprep.subr.mxu0 0.0
        %960 = vmatpush2.msra.mxu0 0.0
        %961 = vmatprep.subr.mxu0 0.0
        %962 = vmatpush2.msra.mxu0 0.0
        %963 = vmatprep.subr.mxu0 0.0
        %964 = vmatpush2.msra.mxu0 0.0
        %965 = vmatprep.subr.mxu0 0.0
        %966 = vmatpush2.msra.mxu0 0.0
        %967 = vmatprep.subr.mxu0 0.0
        %968 = vmatpush2.msra.mxu0 0.0
        %969 = vmatprep.subr.mxu0 0.0
        %970 = vmatpush2.msra.mxu0 0.0
        %971 = vmatprep.subr.mxu0 0.0
        %972 = vmatpush2.msra.mxu0 0.0
        %973 = vmatprep.subr.mxu0 0.0
        %974 = vmatpush2.msra.mxu0 0.0
        %975 = vmatprep.subr.mxu0 0.0
        %976 = vmatpush2.msra.mxu0 0.0
        %977 = vmatprep.subr.mxu0 0.0
        %978 = vmatpush2.msra.mxu0 0.0
        %979 = vmatprep.mubr.f32.mxu0 0.0
        %980 = vmatmul.mubr.f32.gmra.mxu0 %v349
        %v981 = vpop.f32.mrf.mxu0
        %v982 = vadd.f32 %v913, %v981
        %v983 = vpop.f32.mrf.mxu0
        %984 = vdwg.mxu0
        %s985 = scalar_lea.vmem %s3, 32
        %v986 = vld [vmem:[%s985] sm:$0xff]
        %v987 = vld [vmem:[%s985 + $0x8] sm:$0xff]
        %v988 = vld [vmem:[%s985 + $0x10] sm:$0xff]
        %v989 = vld [vmem:[%s985 + $0x18] sm:$0xff]
        %s990 = scalar_lea.vmem %s6, 1
        %v991 = vld [vmem:[%s990] sm:$0x1]
        %v993 = vlaneseq
        %v994 = vshrl.u32 %v993, 7
        %v995 = vsub.s32 0, %v994
        %v996 = vrot.slane %v991, %v995
        %998 = vmatprep.subr.mxu0 0.0
        %999 = vmatpush1.msra.mxu0 0.0
        %1000 = vmatprep.subr.mxu0 0.0
        %1001 = vmatpush1.msra.mxu0 0.0
        %1002 = vmatprep.subr.mxu0 0.0
        %1003 = vmatpush1.msra.mxu0 0.0
        %1004 = vmatprep.subr.mxu0 0.0
        %1005 = vmatpush1.msra.mxu0 0.0
        %1006 = vmatprep.subr.mxu0 0.0
        %1007 = vmatpush1.msra.mxu0 0.0
        %1008 = vmatprep.subr.mxu0 0.0
        %1009 = vmatpush1.msra.mxu0 0.0
        %1010 = vmatprep.subr.mxu0 0.0
        %1011 = vmatpush1.msra.mxu0 0.0
        %1012 = vmatprep.subr.mxu0 0.0
        %1013 = vmatpush1.msra.mxu0 0.0
        %1014 = vmatprep.subr.mxu0 0.0
        %1015 = vmatpush1.msra.mxu0 0.0
        %1016 = vmatprep.subr.mxu0 0.0
        %1017 = vmatpush1.msra.mxu0 0.0
        %1018 = vmatprep.subr.mxu0 0.0
        %1019 = vmatpush1.msra.mxu0 0.0
        %1020 = vmatprep.subr.mxu0 0.0
        %1021 = vmatpush1.msra.mxu0 0.0
        %1022 = vmatprep.subr.mxu0 0.0
        %1023 = vmatpush1.msra.mxu0 %v989
        %1024 = vmatprep.subr.mxu0 0.0
        %1025 = vmatpush1.msra.mxu0 %v988
        %1026 = vmatprep.subr.mxu0 0.0
        %1027 = vmatpush1.msra.mxu0 %v987
        %1028 = vmatprep.subr.mxu0 0.0
        %1029 = vmatpush1.msra.mxu0 %v986
        %1030 = vmatprep.subr.mxu0 0.0
        %1031 = vmatpush2.msra.mxu0 0.0
        %1032 = vmatprep.subr.mxu0 0.0
        %1033 = vmatpush2.msra.mxu0 0.0
        %1034 = vmatprep.subr.mxu0 0.0
        %1035 = vmatpush2.msra.mxu0 0.0
        %1036 = vmatprep.subr.mxu0 0.0
        %1037 = vmatpush2.msra.mxu0 0.0
        %1038 = vmatprep.subr.mxu0 0.0
        %1039 = vmatpush2.msra.mxu0 0.0
        %1040 = vmatprep.subr.mxu0 0.0
        %1041 = vmatpush2.msra.mxu0 0.0
        %1042 = vmatprep.subr.mxu0 0.0
        %1043 = vmatpush2.msra.mxu0 0.0
        %1044 = vmatprep.subr.mxu0 0.0
        %1045 = vmatpush2.msra.mxu0 0.0
        %1046 = vmatprep.subr.mxu0 0.0
        %1047 = vmatpush2.msra.mxu0 0.0
        %1048 = vmatprep.subr.mxu0 0.0
        %1049 = vmatpush2.msra.mxu0 0.0
        %1050 = vmatprep.subr.mxu0 0.0
        %1051 = vmatpush2.msra.mxu0 0.0
        %1052 = vmatprep.subr.mxu0 0.0
        %1053 = vmatpush2.msra.mxu0 0.0
        %1054 = vmatprep.subr.mxu0 0.0
        %1055 = vmatpush2.msra.mxu0 0.0
        %1056 = vmatprep.subr.mxu0 0.0
        %1057 = vmatpush2.msra.mxu0 0.0
        %1058 = vmatprep.subr.mxu0 0.0
        %1059 = vmatpush2.msra.mxu0 0.0
        %1060 = vmatprep.subr.mxu0 0.0
        %1061 = vmatpush2.msra.mxu0 0.0
        %1062 = vmatprep.mubr.f32.mxu0 0.0
        %1063 = vmatmul.mubr.f32.gmra.mxu0 %v349
        %v1064 = vpop.f32.mrf.mxu0
        %v1065 = vadd.f32 %v996, %v1064
        %v1066 = vpop.f32.mrf.mxu0
        %1067 = vdwg.mxu0
        %v1069 = vsel %vm583, %v899, 0
        %v1072 = vsel %vm583, %v982, 0
        %1074 = vmatprep.subr.mxu0 0.0
        %1075 = vmatpush1.xpose.msra.mxu0 0.0
        %1076 = vmatprep.subr.mxu0 0.0
        %1077 = vmatpush1.xpose.msra.mxu0 0.0
        %1078 = vmatprep.subr.mxu0 0.0
        %1079 = vmatpush1.xpose.msra.mxu0 0.0
        %1080 = vmatprep.subr.mxu0 0.0
        %1081 = vmatpush1.xpose.msra.mxu0 0.0
        %1082 = vmatprep.subr.mxu0 0.0
        %1083 = vmatpush1.xpose.msra.mxu0 0.0
        %1084 = vmatprep.subr.mxu0 0.0
        %1085 = vmatpush1.xpose.msra.mxu0 0.0
        %1086 = vmatprep.subr.mxu0 0.0
        %1087 = vmatpush1.xpose.msra.mxu0 0.0
        %1088 = vmatprep.subr.mxu0 0.0
        %1089 = vmatpush1.xpose.msra.mxu0 0.0
        %1090 = vmatprep.subr.mxu0 0.0
        %1091 = vmatpush1.xpose.msra.mxu0 0.0
        %1092 = vmatprep.subr.mxu0 0.0
        %1093 = vmatpush1.xpose.msra.mxu0 0.0
        %1094 = vmatprep.subr.mxu0 0.0
        %1095 = vmatpush1.xpose.msra.mxu0 0.0
        %1096 = vmatprep.subr.mxu0 0.0
        %1097 = vmatpush1.xpose.msra.mxu0 0.0
        %1098 = vmatprep.subr.mxu0 0.0
        %1099 = vmatpush1.xpose.msra.mxu0 0.0
        %1100 = vmatprep.subr.mxu0 0.0
        %1101 = vmatpush1.xpose.msra.mxu0 0.0
        %1102 = vmatprep.subr.mxu0 0.0
        %1103 = vmatpush1.xpose.msra.mxu0 0.0
        %1104 = vmatprep.subr.mxu0 0.0
        %1105 = vmatpush1.xpose.msra.mxu0 %v1072
        %1106 = vmatprep.subr.mxu0 0.0
        %1107 = vmatpush2.xpose.msra.mxu0 0.0
        %1108 = vmatprep.subr.mxu0 0.0
        %1109 = vmatpush2.xpose.msra.mxu0 0.0
        %1110 = vmatprep.subr.mxu0 0.0
        %1111 = vmatpush2.xpose.msra.mxu0 0.0
        %1112 = vmatprep.subr.mxu0 0.0
        %1113 = vmatpush2.xpose.msra.mxu0 0.0
        %1114 = vmatprep.subr.mxu0 0.0
        %1115 = vmatpush2.xpose.msra.mxu0 0.0
        %1116 = vmatprep.subr.mxu0 0.0
        %1117 = vmatpush2.xpose.msra.mxu0 0.0
        %1118 = vmatprep.subr.mxu0 0.0
        %1119 = vmatpush2.xpose.msra.mxu0 0.0
        %1120 = vmatprep.subr.mxu0 0.0
        %1121 = vmatpush2.xpose.msra.mxu0 0.0
        %1122 = vmatprep.subr.mxu0 0.0
        %1123 = vmatpush2.xpose.msra.mxu0 0.0
        %1124 = vmatprep.subr.mxu0 0.0
        %1125 = vmatpush2.xpose.msra.mxu0 0.0
        %1126 = vmatprep.subr.mxu0 0.0
        %1127 = vmatpush2.xpose.msra.mxu0 0.0
        %1128 = vmatprep.subr.mxu0 0.0
        %1129 = vmatpush2.xpose.msra.mxu0 0.0
        %1130 = vmatprep.subr.mxu0 0.0
        %1131 = vmatpush2.xpose.msra.mxu0 0.0
        %1132 = vmatprep.subr.mxu0 0.0
        %1133 = vmatpush2.xpose.msra.mxu0 0.0
        %1134 = vmatprep.subr.mxu0 0.0
        %1135 = vmatpush2.xpose.msra.mxu0 0.0
        %1136 = vmatprep.subr.mxu0 0.0
        %1137 = vmatpush2.xpose.msra.mxu0 0.0
        %1138 = vmatprep.mubr.f32.mxu0 0.0
        %1139 = vmatmul.mubr.f32.gmra.mxu0 %v1069
        %v1140 = vpop.f32.mrf.mxu0
        %v1141 = vadd.f32 0.0, %v1140
        %v1142 = vpop.f32.mrf.mxu0
        %1143 = vdwg.mxu0
        %v1144 = vsel %vm583, %v1141, -inf
        %1145 = vmax.xlane.f32.xlu0 %v1144
        %v1146 = vpop.xlane.xlu0 %1145
        %v1147 = vsub.f32 %v1141, %v1146
        %v1148 = vmul.f32 %v1147, 1.442695
        %v1149 = vpow.pop %v1148
        %v1150 = vsel %vm583, %v1149, 0.0
        %1151 = vadd.xlane.f32.xlu0 %v1150
        %v1152 = vpop.xlane.xlu0 %1151
        %v1153 = vrcp.pop %v1152
        %v1154 = vmul.f32 %v1149, %v1153
        %v1156 = vsel %vm583, %v1154, 0
        %1158 = vmatprep.subr.mxu0 0.0
        %1159 = vmatpush1.msra.mxu0 0.0
        %1160 = vmatprep.subr.mxu0 0.0
        %1161 = vmatpush1.msra.mxu0 0.0
        %1162 = vmatprep.subr.mxu0 0.0
        %1163 = vmatpush1.msra.mxu0 0.0
        %1164 = vmatprep.subr.mxu0 0.0
        %1165 = vmatpush1.msra.mxu0 0.0
        %1166 = vmatprep.subr.mxu0 0.0
        %1167 = vmatpush1.msra.mxu0 0.0
        %1168 = vmatprep.subr.mxu0 0.0
        %1169 = vmatpush1.msra.mxu0 0.0
        %1170 = vmatprep.subr.mxu0 0.0
        %1171 = vmatpush1.msra.mxu0 0.0
        %1172 = vmatprep.subr.mxu0 0.0
        %1173 = vmatpush1.msra.mxu0 0.0
        %1174 = vmatprep.subr.mxu0 0.0
        %1175 = vmatpush1.msra.mxu0 0.0
        %1176 = vmatprep.subr.mxu0 0.0
        %1177 = vmatpush1.msra.mxu0 0.0
        %1178 = vmatprep.subr.mxu0 0.0
        %1179 = vmatpush1.msra.mxu0 0.0
        %1180 = vmatprep.subr.mxu0 0.0
        %1181 = vmatpush1.msra.mxu0 0.0
        %1182 = vmatprep.subr.mxu0 0.0
        %1183 = vmatpush1.msra.mxu0 0.0
        %1184 = vmatprep.subr.mxu0 0.0
        %1185 = vmatpush1.msra.mxu0 0.0
        %1186 = vmatprep.subr.mxu0 0.0
        %1187 = vmatpush1.msra.mxu0 0.0
        %1188 = vmatprep.subr.mxu0 0.0
        %1189 = vmatpush1.msra.mxu0 %v1065
        %1190 = vmatprep.subr.mxu0 0.0
        %1191 = vmatpush2.msra.mxu0 0.0
        %1192 = vmatprep.subr.mxu0 0.0
        %1193 = vmatpush2.msra.mxu0 0.0
        %1194 = vmatprep.subr.mxu0 0.0
        %1195 = vmatpush2.msra.mxu0 0.0
        %1196 = vmatprep.subr.mxu0 0.0
        %1197 = vmatpush2.msra.mxu0 0.0
        %1198 = vmatprep.subr.mxu0 0.0
        %1199 = vmatpush2.msra.mxu0 0.0
        %1200 = vmatprep.subr.mxu0 0.0
        %1201 = vmatpush2.msra.mxu0 0.0
        %1202 = vmatprep.subr.mxu0 0.0
        %1203 = vmatpush2.msra.mxu0 0.0
        %1204 = vmatprep.subr.mxu0 0.0
        %1205 = vmatpush2.msra.mxu0 0.0
        %1206 = vmatprep.subr.mxu0 0.0
        %1207 = vmatpush2.msra.mxu0 0.0
        %1208 = vmatprep.subr.mxu0 0.0
        %1209 = vmatpush2.msra.mxu0 0.0
        %1210 = vmatprep.subr.mxu0 0.0
        %1211 = vmatpush2.msra.mxu0 0.0
        %1212 = vmatprep.subr.mxu0 0.0
        %1213 = vmatpush2.msra.mxu0 0.0
        %1214 = vmatprep.subr.mxu0 0.0
        %1215 = vmatpush2.msra.mxu0 0.0
        %1216 = vmatprep.subr.mxu0 0.0
        %1217 = vmatpush2.msra.mxu0 0.0
        %1218 = vmatprep.subr.mxu0 0.0
        %1219 = vmatpush2.msra.mxu0 0.0
        %1220 = vmatprep.subr.mxu0 0.0
        %1221 = vmatpush2.msra.mxu0 0.0
        %1222 = vmatprep.mubr.f32.mxu0 0.0
        %1223 = vmatmul.mubr.f32.gmra.mxu0 %v1156
        %v1224 = vpop.f32.mrf.mxu0
        %v1225 = vadd.f32 0.0, %v1224
        %v1226 = vpop.f32.mrf.mxu0
        %1227 = vdwg.mxu0
        %s1228 = scalar_lea.vmem %s7, 8
        %v1229 = vld [vmem:[%s1228] sm:$0xff]
        %v1231 = vsel %vm583, %v1225, 0
        %1233 = vmatprep.subr.mxu0 0.0
        %1234 = vmatpush1.msra.mxu0 0.0
        %1235 = vmatprep.subr.mxu0 0.0
        %1236 = vmatpush1.msra.mxu0 0.0
        %1237 = vmatprep.subr.mxu0 0.0
        %1238 = vmatpush1.msra.mxu0 0.0
        %1239 = vmatprep.subr.mxu0 0.0
        %1240 = vmatpush1.msra.mxu0 0.0
        %1241 = vmatprep.subr.mxu0 0.0
        %1242 = vmatpush1.msra.mxu0 0.0
        %1243 = vmatprep.subr.mxu0 0.0
        %1244 = vmatpush1.msra.mxu0 0.0
        %1245 = vmatprep.subr.mxu0 0.0
        %1246 = vmatpush1.msra.mxu0 0.0
        %1247 = vmatprep.subr.mxu0 0.0
        %1248 = vmatpush1.msra.mxu0 0.0
        %1249 = vmatprep.subr.mxu0 0.0
        %1250 = vmatpush1.msra.mxu0 0.0
        %1251 = vmatprep.subr.mxu0 0.0
        %1252 = vmatpush1.msra.mxu0 0.0
        %1253 = vmatprep.subr.mxu0 0.0
        %1254 = vmatpush1.msra.mxu0 0.0
        %1255 = vmatprep.subr.mxu0 0.0
        %1256 = vmatpush1.msra.mxu0 0.0
        %1257 = vmatprep.subr.mxu0 0.0
        %1258 = vmatpush1.msra.mxu0 0.0
        %1259 = vmatprep.subr.mxu0 0.0
        %1260 = vmatpush1.msra.mxu0 0.0
        %1261 = vmatprep.subr.mxu0 0.0
        %1262 = vmatpush1.msra.mxu0 0.0
        %1263 = vmatprep.subr.mxu0 0.0
        %1264 = vmatpush1.msra.mxu0 %v1229
        %1265 = vmatprep.subr.mxu0 0.0
        %1266 = vmatpush2.msra.mxu0 0.0
        %1267 = vmatprep.subr.mxu0 0.0
        %1268 = vmatpush2.msra.mxu0 0.0
        %1269 = vmatprep.subr.mxu0 0.0
        %1270 = vmatpush2.msra.mxu0 0.0
        %1271 = vmatprep.subr.mxu0 0.0
        %1272 = vmatpush2.msra.mxu0 0.0
        %1273 = vmatprep.subr.mxu0 0.0
        %1274 = vmatpush2.msra.mxu0 0.0
        %1275 = vmatprep.subr.mxu0 0.0
        %1276 = vmatpush2.msra.mxu0 0.0
        %1277 = vmatprep.subr.mxu0 0.0
        %1278 = vmatpush2.msra.mxu0 0.0
        %1279 = vmatprep.subr.mxu0 0.0
        %1280 = vmatpush2.msra.mxu0 0.0
        %1281 = vmatprep.subr.mxu0 0.0
        %1282 = vmatpush2.msra.mxu0 0.0
        %1283 = vmatprep.subr.mxu0 0.0
        %1284 = vmatpush2.msra.mxu0 0.0
        %1285 = vmatprep.subr.mxu0 0.0
        %1286 = vmatpush2.msra.mxu0 0.0
        %1287 = vmatprep.subr.mxu0 0.0
        %1288 = vmatpush2.msra.mxu0 0.0
        %1289 = vmatprep.subr.mxu0 0.0
        %1290 = vmatpush2.msra.mxu0 0.0
        %1291 = vmatprep.subr.mxu0 0.0
        %1292 = vmatpush2.msra.mxu0 0.0
        %1293 = vmatprep.subr.mxu0 0.0
        %1294 = vmatpush2.msra.mxu0 0.0
        %1295 = vmatprep.subr.mxu0 0.0
        %1296 = vmatpush2.msra.mxu0 0.0
        %1297 = vmatprep.mubr.f32.mxu0 0.0
        %1298 = vmatmul.mubr.f32.gmra.mxu0 %v1231
        %v1299 = vpop.f32.mrf.mxu0
        %v1300 = vadd.f32 0.0, %v1299
        %v1301 = vpop.f32.mrf.mxu0
        %1302 = vdwg.mxu0
        %v1303 = vadd.f32 %v818, %v1300
        %s1304 = scalar_lea.vmem %s1, 64
        %v1305 = vld [vmem:[%s1304] sm:$0xff]
        %v1306 = vld [vmem:[%s1304 + $0x8] sm:$0xff]
        %v1307 = vld [vmem:[%s1304 + $0x10] sm:$0xff]
        %v1308 = vld [vmem:[%s1304 + $0x18] sm:$0xff]
        %s1309 = scalar_lea.vmem %s4, 2
        %v1310 = vld [vmem:[%s1309] sm:$0x1]
        %v1312 = vlaneseq
        %v1313 = vshrl.u32 %v1312, 7
        %v1314 = vsub.s32 0, %v1313
        %v1315 = vrot.slane %v1310, %v1314
        %1317 = vmatprep.subr.mxu0 0.0
        %1318 = vmatpush1.msra.mxu0 0.0
        %1319 = vmatprep.subr.mxu0 0.0
        %1320 = vmatpush1.msra.mxu0 0.0
        %1321 = vmatprep.subr.mxu0 0.0
        %1322 = vmatpush1.msra.mxu0 0.0
        %1323 = vmatprep.subr.mxu0 0.0
        %1324 = vmatpush1.msra.mxu0 0.0
        %1325 = vmatprep.subr.mxu0 0.0
        %1326 = vmatpush1.msra.mxu0 0.0
        %1327 = vmatprep.subr.mxu0 0.0
        %1328 = vmatpush1.msra.mxu0 0.0
        %1329 = vmatprep.subr.mxu0 0.0
        %1330 = vmatpush1.msra.mxu0 0.0
        %1331 = vmatprep.subr.mxu0 0.0
        %1332 = vmatpush1.msra.mxu0 0.0
        %1333 = vmatprep.subr.mxu0 0.0
        %1334 = vmatpush1.msra.mxu0 0.0
        %1335 = vmatprep.subr.mxu0 0.0
        %1336 = vmatpush1.msra.mxu0 0.0
        %1337 = vmatprep.subr.mxu0 0.0
        %1338 = vmatpush1.msra.mxu0 0.0
        %1339 = vmatprep.subr.mxu0 0.0
        %1340 = vmatpush1.msra.mxu0 0.0
        %1341 = vmatprep.subr.mxu0 0.0
        %1342 = vmatpush1.msra.mxu0 %v1308
        %1343 = vmatprep.subr.mxu0 0.0
        %1344 = vmatpush1.msra.mxu0 %v1307
        %1345 = vmatprep.subr.mxu0 0.0
        %1346 = vmatpush1.msra.mxu0 %v1306
        %1347 = vmatprep.subr.mxu0 0.0
        %1348 = vmatpush1.msra.mxu0 %v1305
        %1349 = vmatprep.subr.mxu0 0.0
        %1350 = vmatpush2.msra.mxu0 0.0
        %1351 = vmatprep.subr.mxu0 0.0
        %1352 = vmatpush2.msra.mxu0 0.0
        %1353 = vmatprep.subr.mxu0 0.0
        %1354 = vmatpush2.msra.mxu0 0.0
        %1355 = vmatprep.subr.mxu0 0.0
        %1356 = vmatpush2.msra.mxu0 0.0
        %1357 = vmatprep.subr.mxu0 0.0
        %1358 = vmatpush2.msra.mxu0 0.0
        %1359 = vmatprep.subr.mxu0 0.0
        %1360 = vmatpush2.msra.mxu0 0.0
        %1361 = vmatprep.subr.mxu0 0.0
        %1362 = vmatpush2.msra.mxu0 0.0
        %1363 = vmatprep.subr.mxu0 0.0
        %1364 = vmatpush2.msra.mxu0 0.0
        %1365 = vmatprep.subr.mxu0 0.0
        %1366 = vmatpush2.msra.mxu0 0.0
        %1367 = vmatprep.subr.mxu0 0.0
        %1368 = vmatpush2.msra.mxu0 0.0
        %1369 = vmatprep.subr.mxu0 0.0
        %1370 = vmatpush2.msra.mxu0 0.0
        %1371 = vmatprep.subr.mxu0 0.0
        %1372 = vmatpush2.msra.mxu0 0.0
        %1373 = vmatprep.subr.mxu0 0.0
        %1374 = vmatpush2.msra.mxu0 0.0
        %1375 = vmatprep.subr.mxu0 0.0
        %1376 = vmatpush2.msra.mxu0 0.0
        %1377 = vmatprep.subr.mxu0 0.0
        %1378 = vmatpush2.msra.mxu0 0.0
        %1379 = vmatprep.subr.mxu0 0.0
        %1380 = vmatpush2.msra.mxu0 0.0
        %1381 = vmatprep.mubr.f32.mxu0 0.0
        %1382 = vmatmul.mubr.f32.gmra.mxu0 %v349
        %v1383 = vpop.f32.mrf.mxu0
        %v1384 = vadd.f32 %v1315, %v1383
        %v1385 = vpop.f32.mrf.mxu0
        %1386 = vdwg.mxu0
        %s1387 = scalar_lea.vmem %s2, 64
        %v1388 = vld [vmem:[%s1387] sm:$0xff]
        %v1389 = vld [vmem:[%s1387 + $0x8] sm:$0xff]
        %v1390 = vld [vmem:[%s1387 + $0x10] sm:$0xff]
        %v1391 = vld [vmem:[%s1387 + $0x18] sm:$0xff]
        %s1392 = scalar_lea.vmem %s5, 2
        %v1393 = vld [vmem:[%s1392] sm:$0x1]
        %v1395 = vlaneseq
        %v1396 = vshrl.u32 %v1395, 7
        %v1397 = vsub.s32 0, %v1396
        %v1398 = vrot.slane %v1393, %v1397
        %1400 = vmatprep.subr.mxu0 0.0
        %1401 = vmatpush1.msra.mxu0 0.0
        %1402 = vmatprep.subr.mxu0 0.0
        %1403 = vmatpush1.msra.mxu0 0.0
        %1404 = vmatprep.subr.mxu0 0.0
        %1405 = vmatpush1.msra.mxu0 0.0
        %1406 = vmatprep.subr.mxu0 0.0
        %1407 = vmatpush1.msra.mxu0 0.0
        %1408 = vmatprep.subr.mxu0 0.0
        %1409 = vmatpush1.msra.mxu0 0.0
        %1410 = vmatprep.subr.mxu0 0.0
        %1411 = vmatpush1.msra.mxu0 0.0
        %1412 = vmatprep.subr.mxu0 0.0
        %1413 = vmatpush1.msra.mxu0 0.0
        %1414 = vmatprep.subr.mxu0 0.0
        %1415 = vmatpush1.msra.mxu0 0.0
        %1416 = vmatprep.subr.mxu0 0.0
        %1417 = vmatpush1.msra.mxu0 0.0
        %1418 = vmatprep.subr.mxu0 0.0
        %1419 = vmatpush1.msra.mxu0 0.0
        %1420 = vmatprep.subr.mxu0 0.0
        %1421 = vmatpush1.msra.mxu0 0.0
        %1422 = vmatprep.subr.mxu0 0.0
        %1423 = vmatpush1.msra.mxu0 0.0
        %1424 = vmatprep.subr.mxu0 0.0
        %1425 = vmatpush1.msra.mxu0 %v1391
        %1426 = vmatprep.subr.mxu0 0.0
        %1427 = vmatpush1.msra.mxu0 %v1390
        %1428 = vmatprep.subr.mxu0 0.0
        %1429 = vmatpush1.msra.mxu0 %v1389
        %1430 = vmatprep.subr.mxu0 0.0
        %1431 = vmatpush1.msra.mxu0 %v1388
        %1432 = vmatprep.subr.mxu0 0.0
        %1433 = vmatpush2.msra.mxu0 0.0
        %1434 = vmatprep.subr.mxu0 0.0
        %1435 = vmatpush2.msra.mxu0 0.0
        %1436 = vmatprep.subr.mxu0 0.0
        %1437 = vmatpush2.msra.mxu0 0.0
        %1438 = vmatprep.subr.mxu0 0.0
        %1439 = vmatpush2.msra.mxu0 0.0
        %1440 = vmatprep.subr.mxu0 0.0
        %1441 = vmatpush2.msra.mxu0 0.0
        %1442 = vmatprep.subr.mxu0 0.0
        %1443 = vmatpush2.msra.mxu0 0.0
        %1444 = vmatprep.subr.mxu0 0.0
        %1445 = vmatpush2.msra.mxu0 0.0
        %1446 = vmatprep.subr.mxu0 0.0
        %1447 = vmatpush2.msra.mxu0 0.0
        %1448 = vmatprep.subr.mxu0 0.0
        %1449 = vmatpush2.msra.mxu0 0.0
        %1450 = vmatprep.subr.mxu0 0.0
        %1451 = vmatpush2.msra.mxu0 0.0
        %1452 = vmatprep.subr.mxu0 0.0
        %1453 = vmatpush2.msra.mxu0 0.0
        %1454 = vmatprep.subr.mxu0 0.0
        %1455 = vmatpush2.msra.mxu0 0.0
        %1456 = vmatprep.subr.mxu0 0.0
        %1457 = vmatpush2.msra.mxu0 0.0
        %1458 = vmatprep.subr.mxu0 0.0
        %1459 = vmatpush2.msra.mxu0 0.0
        %1460 = vmatprep.subr.mxu0 0.0
        %1461 = vmatpush2.msra.mxu0 0.0
        %1462 = vmatprep.subr.mxu0 0.0
        %1463 = vmatpush2.msra.mxu0 0.0
        %1464 = vmatprep.mubr.f32.mxu0 0.0
        %1465 = vmatmul.mubr.f32.gmra.mxu0 %v349
        %v1466 = vpop.f32.mrf.mxu0
        %v1467 = vadd.f32 %v1398, %v1466
        %v1468 = vpop.f32.mrf.mxu0
        %1469 = vdwg.mxu0
        %s1470 = scalar_lea.vmem %s3, 64
        %v1471 = vld [vmem:[%s1470] sm:$0xff]
        %v1472 = vld [vmem:[%s1470 + $0x8] sm:$0xff]
        %v1473 = vld [vmem:[%s1470 + $0x10] sm:$0xff]
        %v1474 = vld [vmem:[%s1470 + $0x18] sm:$0xff]
        %s1475 = scalar_lea.vmem %s6, 2
        %v1476 = vld [vmem:[%s1475] sm:$0x1]
        %v1478 = vlaneseq
        %v1479 = vshrl.u32 %v1478, 7
        %v1480 = vsub.s32 0, %v1479
        %v1481 = vrot.slane %v1476, %v1480
        %1483 = vmatprep.subr.mxu0 0.0
        %1484 = vmatpush1.msra.mxu0 0.0
        %1485 = vmatprep.subr.mxu0 0.0
        %1486 = vmatpush1.msra.mxu0 0.0
        %1487 = vmatprep.subr.mxu0 0.0
        %1488 = vmatpush1.msra.mxu0 0.0
        %1489 = vmatprep.subr.mxu0 0.0
        %1490 = vmatpush1.msra.mxu0 0.0
        %1491 = vmatprep.subr.mxu0 0.0
        %1492 = vmatpush1.msra.mxu0 0.0
        %1493 = vmatprep.subr.mxu0 0.0
        %1494 = vmatpush1.msra.mxu0 0.0
        %1495 = vmatprep.subr.mxu0 0.0
        %1496 = vmatpush1.msra.mxu0 0.0
        %1497 = vmatprep.subr.mxu0 0.0
        %1498 = vmatpush1.msra.mxu0 0.0
        %1499 = vmatprep.subr.mxu0 0.0
        %1500 = vmatpush1.msra.mxu0 0.0
        %1501 = vmatprep.subr.mxu0 0.0
        %1502 = vmatpush1.msra.mxu0 0.0
        %1503 = vmatprep.subr.mxu0 0.0
        %1504 = vmatpush1.msra.mxu0 0.0
        %1505 = vmatprep.subr.mxu0 0.0
        %1506 = vmatpush1.msra.mxu0 0.0
        %1507 = vmatprep.subr.mxu0 0.0
        %1508 = vmatpush1.msra.mxu0 %v1474
        %1509 = vmatprep.subr.mxu0 0.0
        %1510 = vmatpush1.msra.mxu0 %v1473
        %1511 = vmatprep.subr.mxu0 0.0
        %1512 = vmatpush1.msra.mxu0 %v1472
        %1513 = vmatprep.subr.mxu0 0.0
        %1514 = vmatpush1.msra.mxu0 %v1471
        %1515 = vmatprep.subr.mxu0 0.0
        %1516 = vmatpush2.msra.mxu0 0.0
        %1517 = vmatprep.subr.mxu0 0.0
        %1518 = vmatpush2.msra.mxu0 0.0
        %1519 = vmatprep.subr.mxu0 0.0
        %1520 = vmatpush2.msra.mxu0 0.0
        %1521 = vmatprep.subr.mxu0 0.0
        %1522 = vmatpush2.msra.mxu0 0.0
        %1523 = vmatprep.subr.mxu0 0.0
        %1524 = vmatpush2.msra.mxu0 0.0
        %1525 = vmatprep.subr.mxu0 0.0
        %1526 = vmatpush2.msra.mxu0 0.0
        %1527 = vmatprep.subr.mxu0 0.0
        %1528 = vmatpush2.msra.mxu0 0.0
        %1529 = vmatprep.subr.mxu0 0.0
        %1530 = vmatpush2.msra.mxu0 0.0
        %1531 = vmatprep.subr.mxu0 0.0
        %1532 = vmatpush2.msra.mxu0 0.0
        %1533 = vmatprep.subr.mxu0 0.0
        %1534 = vmatpush2.msra.mxu0 0.0
        %1535 = vmatprep.subr.mxu0 0.0
        %1536 = vmatpush2.msra.mxu0 0.0
        %1537 = vmatprep.subr.mxu0 0.0
        %1538 = vmatpush2.msra.mxu0 0.0
        %1539 = vmatprep.subr.mxu0 0.0
        %1540 = vmatpush2.msra.mxu0 0.0
        %1541 = vmatprep.subr.mxu0 0.0
        %1542 = vmatpush2.msra.mxu0 0.0
        %1543 = vmatprep.subr.mxu0 0.0
        %1544 = vmatpush2.msra.mxu0 0.0
        %1545 = vmatprep.subr.mxu0 0.0
        %1546 = vmatpush2.msra.mxu0 0.0
        %1547 = vmatprep.mubr.f32.mxu0 0.0
        %1548 = vmatmul.mubr.f32.gmra.mxu0 %v349
        %v1549 = vpop.f32.mrf.mxu0
        %v1550 = vadd.f32 %v1481, %v1549
        %v1551 = vpop.f32.mrf.mxu0
        %1552 = vdwg.mxu0
        %v1554 = vsel %vm583, %v1384, 0
        %v1557 = vsel %vm583, %v1467, 0
        %1559 = vmatprep.subr.mxu0 0.0
        %1560 = vmatpush1.xpose.msra.mxu0 0.0
        %1561 = vmatprep.subr.mxu0 0.0
        %1562 = vmatpush1.xpose.msra.mxu0 0.0
        %1563 = vmatprep.subr.mxu0 0.0
        %1564 = vmatpush1.xpose.msra.mxu0 0.0
        %1565 = vmatprep.subr.mxu0 0.0
        %1566 = vmatpush1.xpose.msra.mxu0 0.0
        %1567 = vmatprep.subr.mxu0 0.0
        %1568 = vmatpush1.xpose.msra.mxu0 0.0
        %1569 = vmatprep.subr.mxu0 0.0
        %1570 = vmatpush1.xpose.msra.mxu0 0.0
        %1571 = vmatprep.subr.mxu0 0.0
        %1572 = vmatpush1.xpose.msra.mxu0 0.0
        %1573 = vmatprep.subr.mxu0 0.0
        %1574 = vmatpush1.xpose.msra.mxu0 0.0
        %1575 = vmatprep.subr.mxu0 0.0
        %1576 = vmatpush1.xpose.msra.mxu0 0.0
        %1577 = vmatprep.subr.mxu0 0.0
        %1578 = vmatpush1.xpose.msra.mxu0 0.0
        %1579 = vmatprep.subr.mxu0 0.0
        %1580 = vmatpush1.xpose.msra.mxu0 0.0
        %1581 = vmatprep.subr.mxu0 0.0
        %1582 = vmatpush1.xpose.msra.mxu0 0.0
        %1583 = vmatprep.subr.mxu0 0.0
        %1584 = vmatpush1.xpose.msra.mxu0 0.0
        %1585 = vmatprep.subr.mxu0 0.0
        %1586 = vmatpush1.xpose.msra.mxu0 0.0
        %1587 = vmatprep.subr.mxu0 0.0
        %1588 = vmatpush1.xpose.msra.mxu0 0.0
        %1589 = vmatprep.subr.mxu0 0.0
        %1590 = vmatpush1.xpose.msra.mxu0 %v1557
        %1591 = vmatprep.subr.mxu0 0.0
        %1592 = vmatpush2.xpose.msra.mxu0 0.0
        %1593 = vmatprep.subr.mxu0 0.0
        %1594 = vmatpush2.xpose.msra.mxu0 0.0
        %1595 = vmatprep.subr.mxu0 0.0
        %1596 = vmatpush2.xpose.msra.mxu0 0.0
        %1597 = vmatprep.subr.mxu0 0.0
        %1598 = vmatpush2.xpose.msra.mxu0 0.0
        %1599 = vmatprep.subr.mxu0 0.0
        %1600 = vmatpush2.xpose.msra.mxu0 0.0
        %1601 = vmatprep.subr.mxu0 0.0
        %1602 = vmatpush2.xpose.msra.mxu0 0.0
        %1603 = vmatprep.subr.mxu0 0.0
        %1604 = vmatpush2.xpose.msra.mxu0 0.0
        %1605 = vmatprep.subr.mxu0 0.0
        %1606 = vmatpush2.xpose.msra.mxu0 0.0
        %1607 = vmatprep.subr.mxu0 0.0
        %1608 = vmatpush2.xpose.msra.mxu0 0.0
        %1609 = vmatprep.subr.mxu0 0.0
        %1610 = vmatpush2.xpose.msra.mxu0 0.0
        %1611 = vmatprep.subr.mxu0 0.0
        %1612 = vmatpush2.xpose.msra.mxu0 0.0
        %1613 = vmatprep.subr.mxu0 0.0
        %1614 = vmatpush2.xpose.msra.mxu0 0.0
        %1615 = vmatprep.subr.mxu0 0.0
        %1616 = vmatpush2.xpose.msra.mxu0 0.0
        %1617 = vmatprep.subr.mxu0 0.0
        %1618 = vmatpush2.xpose.msra.mxu0 0.0
        %1619 = vmatprep.subr.mxu0 0.0
        %1620 = vmatpush2.xpose.msra.mxu0 0.0
        %1621 = vmatprep.subr.mxu0 0.0
        %1622 = vmatpush2.xpose.msra.mxu0 0.0
        %1623 = vmatprep.mubr.f32.mxu0 0.0
        %1624 = vmatmul.mubr.f32.gmra.mxu0 %v1554
        %v1625 = vpop.f32.mrf.mxu0
        %v1626 = vadd.f32 0.0, %v1625
        %v1627 = vpop.f32.mrf.mxu0
        %1628 = vdwg.mxu0
        %v1629 = vsel %vm583, %v1626, -inf
        %1630 = vmax.xlane.f32.xlu0 %v1629
        %v1631 = vpop.xlane.xlu0 %1630
        %v1632 = vsub.f32 %v1626, %v1631
        %v1633 = vmul.f32 %v1632, 1.442695
        %v1634 = vpow.pop %v1633
        %v1635 = vsel %vm583, %v1634, 0.0
        %1636 = vadd.xlane.f32.xlu0 %v1635
        %v1637 = vpop.xlane.xlu0 %1636
        %v1638 = vrcp.pop %v1637
        %v1639 = vmul.f32 %v1634, %v1638
        %v1641 = vsel %vm583, %v1639, 0
        %1643 = vmatprep.subr.mxu0 0.0
        %1644 = vmatpush1.msra.mxu0 0.0
        %1645 = vmatprep.subr.mxu0 0.0
        %1646 = vmatpush1.msra.mxu0 0.0
        %1647 = vmatprep.subr.mxu0 0.0
        %1648 = vmatpush1.msra.mxu0 0.0
        %1649 = vmatprep.subr.mxu0 0.0
        %1650 = vmatpush1.msra.mxu0 0.0
        %1651 = vmatprep.subr.mxu0 0.0
        %1652 = vmatpush1.msra.mxu0 0.0
        %1653 = vmatprep.subr.mxu0 0.0
        %1654 = vmatpush1.msra.mxu0 0.0
        %1655 = vmatprep.subr.mxu0 0.0
        %1656 = vmatpush1.msra.mxu0 0.0
        %1657 = vmatprep.subr.mxu0 0.0
        %1658 = vmatpush1.msra.mxu0 0.0
        %1659 = vmatprep.subr.mxu0 0.0
        %1660 = vmatpush1.msra.mxu0 0.0
        %1661 = vmatprep.subr.mxu0 0.0
        %1662 = vmatpush1.msra.mxu0 0.0
        %1663 = vmatprep.subr.mxu0 0.0
        %1664 = vmatpush1.msra.mxu0 0.0
        %1665 = vmatprep.subr.mxu0 0.0
        %1666 = vmatpush1.msra.mxu0 0.0
        %1667 = vmatprep.subr.mxu0 0.0
        %1668 = vmatpush1.msra.mxu0 0.0
        %1669 = vmatprep.subr.mxu0 0.0
        %1670 = vmatpush1.msra.mxu0 0.0
        %1671 = vmatprep.subr.mxu0 0.0
        %1672 = vmatpush1.msra.mxu0 0.0
        %1673 = vmatprep.subr.mxu0 0.0
        %1674 = vmatpush1.msra.mxu0 %v1550
        %1675 = vmatprep.subr.mxu0 0.0
        %1676 = vmatpush2.msra.mxu0 0.0
        %1677 = vmatprep.subr.mxu0 0.0
        %1678 = vmatpush2.msra.mxu0 0.0
        %1679 = vmatprep.subr.mxu0 0.0
        %1680 = vmatpush2.msra.mxu0 0.0
        %1681 = vmatprep.subr.mxu0 0.0
        %1682 = vmatpush2.msra.mxu0 0.0
        %1683 = vmatprep.subr.mxu0 0.0
        %1684 = vmatpush2.msra.mxu0 0.0
        %1685 = vmatprep.subr.mxu0 0.0
        %1686 = vmatpush2.msra.mxu0 0.0
        %1687 = vmatprep.subr.mxu0 0.0
        %1688 = vmatpush2.msra.mxu0 0.0
        %1689 = vmatprep.subr.mxu0 0.0
        %1690 = vmatpush2.msra.mxu0 0.0
        %1691 = vmatprep.subr.mxu0 0.0
        %1692 = vmatpush2.msra.mxu0 0.0
        %1693 = vmatprep.subr.mxu0 0.0
        %1694 = vmatpush2.msra.mxu0 0.0
        %1695 = vmatprep.subr.mxu0 0.0
        %1696 = vmatpush2.msra.mxu0 0.0
        %1697 = vmatprep.subr.mxu0 0.0
        %1698 = vmatpush2.msra.mxu0 0.0
        %1699 = vmatprep.subr.mxu0 0.0
        %1700 = vmatpush2.msra.mxu0 0.0
        %1701 = vmatprep.subr.mxu0 0.0
        %1702 = vmatpush2.msra.mxu0 0.0
        %1703 = vmatprep.subr.mxu0 0.0
        %1704 = vmatpush2.msra.mxu0 0.0
        %1705 = vmatprep.subr.mxu0 0.0
        %1706 = vmatpush2.msra.mxu0 0.0
        %1707 = vmatprep.mubr.f32.mxu0 0.0
        %1708 = vmatmul.mubr.f32.gmra.mxu0 %v1641
        %v1709 = vpop.f32.mrf.mxu0
        %v1710 = vadd.f32 0.0, %v1709
        %v1711 = vpop.f32.mrf.mxu0
        %1712 = vdwg.mxu0
        %s1713 = scalar_lea.vmem %s7, 16
        %v1714 = vld [vmem:[%s1713] sm:$0xff]
        %v1716 = vsel %vm583, %v1710, 0
        %1718 = vmatprep.subr.mxu0 0.0
        %1719 = vmatpush1.msra.mxu0 0.0
        %1720 = vmatprep.subr.mxu0 0.0
        %1721 = vmatpush1.msra.mxu0 0.0
        %1722 = vmatprep.subr.mxu0 0.0
        %1723 = vmatpush1.msra.mxu0 0.0
        %1724 = vmatprep.subr.mxu0 0.0
        %1725 = vmatpush1.msra.mxu0 0.0
        %1726 = vmatprep.subr.mxu0 0.0
        %1727 = vmatpush1.msra.mxu0 0.0
        %1728 = vmatprep.subr.mxu0 0.0
        %1729 = vmatpush1.msra.mxu0 0.0
        %1730 = vmatprep.subr.mxu0 0.0
        %1731 = vmatpush1.msra.mxu0 0.0
        %1732 = vmatprep.subr.mxu0 0.0
        %1733 = vmatpush1.msra.mxu0 0.0
        %1734 = vmatprep.subr.mxu0 0.0
        %1735 = vmatpush1.msra.mxu0 0.0
        %1736 = vmatprep.subr.mxu0 0.0
        %1737 = vmatpush1.msra.mxu0 0.0
        %1738 = vmatprep.subr.mxu0 0.0
        %1739 = vmatpush1.msra.mxu0 0.0
        %1740 = vmatprep.subr.mxu0 0.0
        %1741 = vmatpush1.msra.mxu0 0.0
        %1742 = vmatprep.subr.mxu0 0.0
        %1743 = vmatpush1.msra.mxu0 0.0
        %1744 = vmatprep.subr.mxu0 0.0
        %1745 = vmatpush1.msra.mxu0 0.0
        %1746 = vmatprep.subr.mxu0 0.0
        %1747 = vmatpush1.msra.mxu0 0.0
        %1748 = vmatprep.subr.mxu0 0.0
        %1749 = vmatpush1.msra.mxu0 %v1714
        %1750 = vmatprep.subr.mxu0 0.0
        %1751 = vmatpush2.msra.mxu0 0.0
        %1752 = vmatprep.subr.mxu0 0.0
        %1753 = vmatpush2.msra.mxu0 0.0
        %1754 = vmatprep.subr.mxu0 0.0
        %1755 = vmatpush2.msra.mxu0 0.0
        %1756 = vmatprep.subr.mxu0 0.0
        %1757 = vmatpush2.msra.mxu0 0.0
        %1758 = vmatprep.subr.mxu0 0.0
        %1759 = vmatpush2.msra.mxu0 0.0
        %1760 = vmatprep.subr.mxu0 0.0
        %1761 = vmatpush2.msra.mxu0 0.0
        %1762 = vmatprep.subr.mxu0 0.0
        %1763 = vmatpush2.msra.mxu0 0.0
        %1764 = vmatprep.subr.mxu0 0.0
        %1765 = vmatpush2.msra.mxu0 0.0
        %1766 = vmatprep.subr.mxu0 0.0
        %1767 = vmatpush2.msra.mxu0 0.0
        %1768 = vmatprep.subr.mxu0 0.0
        %1769 = vmatpush2.msra.mxu0 0.0
        %1770 = vmatprep.subr.mxu0 0.0
        %1771 = vmatpush2.msra.mxu0 0.0
        %1772 = vmatprep.subr.mxu0 0.0
        %1773 = vmatpush2.msra.mxu0 0.0
        %1774 = vmatprep.subr.mxu0 0.0
        %1775 = vmatpush2.msra.mxu0 0.0
        %1776 = vmatprep.subr.mxu0 0.0
        %1777 = vmatpush2.msra.mxu0 0.0
        %1778 = vmatprep.subr.mxu0 0.0
        %1779 = vmatpush2.msra.mxu0 0.0
        %1780 = vmatprep.subr.mxu0 0.0
        %1781 = vmatpush2.msra.mxu0 0.0
        %1782 = vmatprep.mubr.f32.mxu0 0.0
        %1783 = vmatmul.mubr.f32.gmra.mxu0 %v1716
        %v1784 = vpop.f32.mrf.mxu0
        %v1785 = vadd.f32 0.0, %v1784
        %v1786 = vpop.f32.mrf.mxu0
        %1787 = vdwg.mxu0
        %v1788 = vadd.f32 %v1303, %v1785
        %s1789 = scalar_lea.vmem %s1, 96
        %v1790 = vld [vmem:[%s1789] sm:$0xff]
        %v1791 = vld [vmem:[%s1789 + $0x8] sm:$0xff]
        %v1792 = vld [vmem:[%s1789 + $0x10] sm:$0xff]
        %v1793 = vld [vmem:[%s1789 + $0x18] sm:$0xff]
        %s1794 = scalar_lea.vmem %s4, 3
        %v1795 = vld [vmem:[%s1794] sm:$0x1]
        %v1797 = vlaneseq
        %v1798 = vshrl.u32 %v1797, 7
        %v1799 = vsub.s32 0, %v1798
        %v1800 = vrot.slane %v1795, %v1799
        %1802 = vmatprep.subr.mxu0 0.0
        %1803 = vmatpush1.msra.mxu0 0.0
        %1804 = vmatprep.subr.mxu0 0.0
        %1805 = vmatpush1.msra.mxu0 0.0
        %1806 = vmatprep.subr.mxu0 0.0
        %1807 = vmatpush1.msra.mxu0 0.0
        %1808 = vmatprep.subr.mxu0 0.0
        %1809 = vmatpush1.msra.mxu0 0.0
        %1810 = vmatprep.subr.mxu0 0.0
        %1811 = vmatpush1.msra.mxu0 0.0
        %1812 = vmatprep.subr.mxu0 0.0
        %1813 = vmatpush1.msra.mxu0 0.0
        %1814 = vmatprep.subr.mxu0 0.0
        %1815 = vmatpush1.msra.mxu0 0.0
        %1816 = vmatprep.subr.mxu0 0.0
        %1817 = vmatpush1.msra.mxu0 0.0
        %1818 = vmatprep.subr.mxu0 0.0
        %1819 = vmatpush1.msra.mxu0 0.0
        %1820 = vmatprep.subr.mxu0 0.0
        %1821 = vmatpush1.msra.mxu0 0.0
        %1822 = vmatprep.subr.mxu0 0.0
        %1823 = vmatpush1.msra.mxu0 0.0
        %1824 = vmatprep.subr.mxu0 0.0
        %1825 = vmatpush1.msra.mxu0 0.0
        %1826 = vmatprep.subr.mxu0 0.0
        %1827 = vmatpush1.msra.mxu0 %v1793
        %1828 = vmatprep.subr.mxu0 0.0
        %1829 = vmatpush1.msra.mxu0 %v1792
        %1830 = vmatprep.subr.mxu0 0.0
        %1831 = vmatpush1.msra.mxu0 %v1791
        %1832 = vmatprep.subr.mxu0 0.0
        %1833 = vmatpush1.msra.mxu0 %v1790
        %1834 = vmatprep.subr.mxu0 0.0
        %1835 = vmatpush2.msra.mxu0 0.0
        %1836 = vmatprep.subr.mxu0 0.0
        %1837 = vmatpush2.msra.mxu0 0.0
        %1838 = vmatprep.subr.mxu0 0.0
        %1839 = vmatpush2.msra.mxu0 0.0
        %1840 = vmatprep.subr.mxu0 0.0
        %1841 = vmatpush2.msra.mxu0 0.0
        %1842 = vmatprep.subr.mxu0 0.0
        %1843 = vmatpush2.msra.mxu0 0.0
        %1844 = vmatprep.subr.mxu0 0.0
        %1845 = vmatpush2.msra.mxu0 0.0
        %1846 = vmatprep.subr.mxu0 0.0
        %1847 = vmatpush2.msra.mxu0 0.0
        %1848 = vmatprep.subr.mxu0 0.0
        %1849 = vmatpush2.msra.mxu0 0.0
        %1850 = vmatprep.subr.mxu0 0.0
        %1851 = vmatpush2.msra.mxu0 0.0
        %1852 = vmatprep.subr.mxu0 0.0
        %1853 = vmatpush2.msra.mxu0 0.0
        %1854 = vmatprep.subr.mxu0 0.0
        %1855 = vmatpush2.msra.mxu0 0.0
        %1856 = vmatprep.subr.mxu0 0.0
        %1857 = vmatpush2.msra.mxu0 0.0
        %1858 = vmatprep.subr.mxu0 0.0
        %1859 = vmatpush2.msra.mxu0 0.0
        %1860 = vmatprep.subr.mxu0 0.0
        %1861 = vmatpush2.msra.mxu0 0.0
        %1862 = vmatprep.subr.mxu0 0.0
        %1863 = vmatpush2.msra.mxu0 0.0
        %1864 = vmatprep.subr.mxu0 0.0
        %1865 = vmatpush2.msra.mxu0 0.0
        %1866 = vmatprep.mubr.f32.mxu0 0.0
        %1867 = vmatmul.mubr.f32.gmra.mxu0 %v349
        %v1868 = vpop.f32.mrf.mxu0
        %v1869 = vadd.f32 %v1800, %v1868
        %v1870 = vpop.f32.mrf.mxu0
        %1871 = vdwg.mxu0
        %s1872 = scalar_lea.vmem %s2, 96
        %v1873 = vld [vmem:[%s1872] sm:$0xff]
        %v1874 = vld [vmem:[%s1872 + $0x8] sm:$0xff]
        %v1875 = vld [vmem:[%s1872 + $0x10] sm:$0xff]
        %v1876 = vld [vmem:[%s1872 + $0x18] sm:$0xff]
        %s1877 = scalar_lea.vmem %s5, 3
        %v1878 = vld [vmem:[%s1877] sm:$0x1]
        %v1880 = vlaneseq
        %v1881 = vshrl.u32 %v1880, 7
        %v1882 = vsub.s32 0, %v1881
        %v1883 = vrot.slane %v1878, %v1882
        %1885 = vmatprep.subr.mxu0 0.0
        %1886 = vmatpush1.msra.mxu0 0.0
        %1887 = vmatprep.subr.mxu0 0.0
        %1888 = vmatpush1.msra.mxu0 0.0
        %1889 = vmatprep.subr.mxu0 0.0
        %1890 = vmatpush1.msra.mxu0 0.0
        %1891 = vmatprep.subr.mxu0 0.0
        %1892 = vmatpush1.msra.mxu0 0.0
        %1893 = vmatprep.subr.mxu0 0.0
        %1894 = vmatpush1.msra.mxu0 0.0
        %1895 = vmatprep.subr.mxu0 0.0
        %1896 = vmatpush1.msra.mxu0 0.0
        %1897 = vmatprep.subr.mxu0 0.0
        %1898 = vmatpush1.msra.mxu0 0.0
        %1899 = vmatprep.subr.mxu0 0.0
        %1900 = vmatpush1.msra.mxu0 0.0
        %1901 = vmatprep.subr.mxu0 0.0
        %1902 = vmatpush1.msra.mxu0 0.0
        %1903 = vmatprep.subr.mxu0 0.0
        %1904 = vmatpush1.msra.mxu0 0.0
        %1905 = vmatprep.subr.mxu0 0.0
        %1906 = vmatpush1.msra.mxu0 0.0
        %1907 = vmatprep.subr.mxu0 0.0
        %1908 = vmatpush1.msra.mxu0 0.0
        %1909 = vmatprep.subr.mxu0 0.0
        %1910 = vmatpush1.msra.mxu0 %v1876
        %1911 = vmatprep.subr.mxu0 0.0
        %1912 = vmatpush1.msra.mxu0 %v1875
        %1913 = vmatprep.subr.mxu0 0.0
        %1914 = vmatpush1.msra.mxu0 %v1874
        %1915 = vmatprep.subr.mxu0 0.0
        %1916 = vmatpush1.msra.mxu0 %v1873
        %1917 = vmatprep.subr.mxu0 0.0
        %1918 = vmatpush2.msra.mxu0 0.0
        %1919 = vmatprep.subr.mxu0 0.0
        %1920 = vmatpush2.msra.mxu0 0.0
        %1921 = vmatprep.subr.mxu0 0.0
        %1922 = vmatpush2.msra.mxu0 0.0
        %1923 = vmatprep.subr.mxu0 0.0
        %1924 = vmatpush2.msra.mxu0 0.0
        %1925 = vmatprep.subr.mxu0 0.0
        %1926 = vmatpush2.msra.mxu0 0.0
        %1927 = vmatprep.subr.mxu0 0.0
        %1928 = vmatpush2.msra.mxu0 0.0
        %1929 = vmatprep.subr.mxu0 0.0
        %1930 = vmatpush2.msra.mxu0 0.0
        %1931 = vmatprep.subr.mxu0 0.0
        %1932 = vmatpush2.msra.mxu0 0.0
        %1933 = vmatprep.subr.mxu0 0.0
        %1934 = vmatpush2.msra.mxu0 0.0
        %1935 = vmatprep.subr.mxu0 0.0
        %1936 = vmatpush2.msra.mxu0 0.0
        %1937 = vmatprep.subr.mxu0 0.0
        %1938 = vmatpush2.msra.mxu0 0.0
        %1939 = vmatprep.subr.mxu0 0.0
        %1940 = vmatpush2.msra.mxu0 0.0
        %1941 = vmatprep.subr.mxu0 0.0
        %1942 = vmatpush2.msra.mxu0 0.0
        %1943 = vmatprep.subr.mxu0 0.0
        %1944 = vmatpush2.msra.mxu0 0.0
        %1945 = vmatprep.subr.mxu0 0.0
        %1946 = vmatpush2.msra.mxu0 0.0
        %1947 = vmatprep.subr.mxu0 0.0
        %1948 = vmatpush2.msra.mxu0 0.0
        %1949 = vmatprep.mubr.f32.mxu0 0.0
        %1950 = vmatmul.mubr.f32.gmra.mxu0 %v349
        %v1951 = vpop.f32.mrf.mxu0
        %v1952 = vadd.f32 %v1883, %v1951
        %v1953 = vpop.f32.mrf.mxu0
        %1954 = vdwg.mxu0
        %s1955 = scalar_lea.vmem %s3, 96
        %v1956 = vld [vmem:[%s1955] sm:$0xff]
        %v1957 = vld [vmem:[%s1955 + $0x8] sm:$0xff]
        %v1958 = vld [vmem:[%s1955 + $0x10] sm:$0xff]
        %v1959 = vld [vmem:[%s1955 + $0x18] sm:$0xff]
        %s1960 = scalar_lea.vmem %s6, 3
        %v1961 = vld [vmem:[%s1960] sm:$0x1]
        %v1963 = vlaneseq
        %v1964 = vshrl.u32 %v1963, 7
        %v1965 = vsub.s32 0, %v1964
        %v1966 = vrot.slane %v1961, %v1965
        %1968 = vmatprep.subr.mxu0 0.0
        %1969 = vmatpush1.msra.mxu0 0.0
        %1970 = vmatprep.subr.mxu0 0.0
        %1971 = vmatpush1.msra.mxu0 0.0
        %1972 = vmatprep.subr.mxu0 0.0
        %1973 = vmatpush1.msra.mxu0 0.0
        %1974 = vmatprep.subr.mxu0 0.0
        %1975 = vmatpush1.msra.mxu0 0.0
        %1976 = vmatprep.subr.mxu0 0.0
        %1977 = vmatpush1.msra.mxu0 0.0
        %1978 = vmatprep.subr.mxu0 0.0
        %1979 = vmatpush1.msra.mxu0 0.0
        %1980 = vmatprep.subr.mxu0 0.0
        %1981 = vmatpush1.msra.mxu0 0.0
        %1982 = vmatprep.subr.mxu0 0.0
        %1983 = vmatpush1.msra.mxu0 0.0
        %1984 = vmatprep.subr.mxu0 0.0
        %1985 = vmatpush1.msra.mxu0 0.0
        %1986 = vmatprep.subr.mxu0 0.0
        %1987 = vmatpush1.msra.mxu0 0.0
        %1988 = vmatprep.subr.mxu0 0.0
        %1989 = vmatpush1.msra.mxu0 0.0
        %1990 = vmatprep.subr.mxu0 0.0
        %1991 = vmatpush1.msra.mxu0 0.0
        %1992 = vmatprep.subr.mxu0 0.0
        %1993 = vmatpush1.msra.mxu0 %v1959
        %1994 = vmatprep.subr.mxu0 0.0
        %1995 = vmatpush1.msra.mxu0 %v1958
        %1996 = vmatprep.subr.mxu0 0.0
        %1997 = vmatpush1.msra.mxu0 %v1957
        %1998 = vmatprep.subr.mxu0 0.0
        %1999 = vmatpush1.msra.mxu0 %v1956
        %2000 = vmatprep.subr.mxu0 0.0
        %2001 = vmatpush2.msra.mxu0 0.0
        %2002 = vmatprep.subr.mxu0 0.0
        %2003 = vmatpush2.msra.mxu0 0.0
        %2004 = vmatprep.subr.mxu0 0.0
        %2005 = vmatpush2.msra.mxu0 0.0
        %2006 = vmatprep.subr.mxu0 0.0
        %2007 = vmatpush2.msra.mxu0 0.0
        %2008 = vmatprep.subr.mxu0 0.0
        %2009 = vmatpush2.msra.mxu0 0.0
        %2010 = vmatprep.subr.mxu0 0.0
        %2011 = vmatpush2.msra.mxu0 0.0
        %2012 = vmatprep.subr.mxu0 0.0
        %2013 = vmatpush2.msra.mxu0 0.0
        %2014 = vmatprep.subr.mxu0 0.0
        %2015 = vmatpush2.msra.mxu0 0.0
        %2016 = vmatprep.subr.mxu0 0.0
        %2017 = vmatpush2.msra.mxu0 0.0
        %2018 = vmatprep.subr.mxu0 0.0
        %2019 = vmatpush2.msra.mxu0 0.0
        %2020 = vmatprep.subr.mxu0 0.0
        %2021 = vmatpush2.msra.mxu0 0.0
        %2022 = vmatprep.subr.mxu0 0.0
        %2023 = vmatpush2.msra.mxu0 0.0
        %2024 = vmatprep.subr.mxu0 0.0
        %2025 = vmatpush2.msra.mxu0 0.0
        %2026 = vmatprep.subr.mxu0 0.0
        %2027 = vmatpush2.msra.mxu0 0.0
        %2028 = vmatprep.subr.mxu0 0.0
        %2029 = vmatpush2.msra.mxu0 0.0
        %2030 = vmatprep.subr.mxu0 0.0
        %2031 = vmatpush2.msra.mxu0 0.0
        %2032 = vmatprep.mubr.f32.mxu0 0.0
        %2033 = vmatmul.mubr.f32.gmra.mxu0 %v349
        %v2034 = vpop.f32.mrf.mxu0
        %v2035 = vadd.f32 %v1966, %v2034
        %v2036 = vpop.f32.mrf.mxu0
        %2037 = vdwg.mxu0
        %v2039 = vsel %vm583, %v1869, 0
        %v2042 = vsel %vm583, %v1952, 0
        %2044 = vmatprep.subr.mxu0 0.0
        %2045 = vmatpush1.xpose.msra.mxu0 0.0
        %2046 = vmatprep.subr.mxu0 0.0
        %2047 = vmatpush1.xpose.msra.mxu0 0.0
        %2048 = vmatprep.subr.mxu0 0.0
        %2049 = vmatpush1.xpose.msra.mxu0 0.0
        %2050 = vmatprep.subr.mxu0 0.0
        %2051 = vmatpush1.xpose.msra.mxu0 0.0
        %2052 = vmatprep.subr.mxu0 0.0
        %2053 = vmatpush1.xpose.msra.mxu0 0.0
        %2054 = vmatprep.subr.mxu0 0.0
        %2055 = vmatpush1.xpose.msra.mxu0 0.0
        %2056 = vmatprep.subr.mxu0 0.0
        %2057 = vmatpush1.xpose.msra.mxu0 0.0
        %2058 = vmatprep.subr.mxu0 0.0
        %2059 = vmatpush1.xpose.msra.mxu0 0.0
        %2060 = vmatprep.subr.mxu0 0.0
        %2061 = vmatpush1.xpose.msra.mxu0 0.0
        %2062 = vmatprep.subr.mxu0 0.0
        %2063 = vmatpush1.xpose.msra.mxu0 0.0
        %2064 = vmatprep.subr.mxu0 0.0
        %2065 = vmatpush1.xpose.msra.mxu0 0.0
        %2066 = vmatprep.subr.mxu0 0.0
        %2067 = vmatpush1.xpose.msra.mxu0 0.0
        %2068 = vmatprep.subr.mxu0 0.0
        %2069 = vmatpush1.xpose.msra.mxu0 0.0
        %2070 = vmatprep.subr.mxu0 0.0
        %2071 = vmatpush1.xpose.msra.mxu0 0.0
        %2072 = vmatprep.subr.mxu0 0.0
        %2073 = vmatpush1.xpose.msra.mxu0 0.0
        %2074 = vmatprep.subr.mxu0 0.0
        %2075 = vmatpush1.xpose.msra.mxu0 %v2042
        %2076 = vmatprep.subr.mxu0 0.0
        %2077 = vmatpush2.xpose.msra.mxu0 0.0
        %2078 = vmatprep.subr.mxu0 0.0
        %2079 = vmatpush2.xpose.msra.mxu0 0.0
        %2080 = vmatprep.subr.mxu0 0.0
        %2081 = vmatpush2.xpose.msra.mxu0 0.0
        %2082 = vmatprep.subr.mxu0 0.0
        %2083 = vmatpush2.xpose.msra.mxu0 0.0
        %2084 = vmatprep.subr.mxu0 0.0
        %2085 = vmatpush2.xpose.msra.mxu0 0.0
        %2086 = vmatprep.subr.mxu0 0.0
        %2087 = vmatpush2.xpose.msra.mxu0 0.0
        %2088 = vmatprep.subr.mxu0 0.0
        %2089 = vmatpush2.xpose.msra.mxu0 0.0
        %2090 = vmatprep.subr.mxu0 0.0
        %2091 = vmatpush2.xpose.msra.mxu0 0.0
        %2092 = vmatprep.subr.mxu0 0.0
        %2093 = vmatpush2.xpose.msra.mxu0 0.0
        %2094 = vmatprep.subr.mxu0 0.0
        %2095 = vmatpush2.xpose.msra.mxu0 0.0
        %2096 = vmatprep.subr.mxu0 0.0
        %2097 = vmatpush2.xpose.msra.mxu0 0.0
        %2098 = vmatprep.subr.mxu0 0.0
        %2099 = vmatpush2.xpose.msra.mxu0 0.0
        %2100 = vmatprep.subr.mxu0 0.0
        %2101 = vmatpush2.xpose.msra.mxu0 0.0
        %2102 = vmatprep.subr.mxu0 0.0
        %2103 = vmatpush2.xpose.msra.mxu0 0.0
        %2104 = vmatprep.subr.mxu0 0.0
        %2105 = vmatpush2.xpose.msra.mxu0 0.0
        %2106 = vmatprep.subr.mxu0 0.0
        %2107 = vmatpush2.xpose.msra.mxu0 0.0
        %2108 = vmatprep.mubr.f32.mxu0 0.0
        %2109 = vmatmul.mubr.f32.gmra.mxu0 %v2039
        %v2110 = vpop.f32.mrf.mxu0
        %v2111 = vadd.f32 0.0, %v2110
        %v2112 = vpop.f32.mrf.mxu0
        %2113 = vdwg.mxu0
        %v2114 = vsel %vm583, %v2111, -inf
        %2115 = vmax.xlane.f32.xlu0 %v2114
        %v2116 = vpop.xlane.xlu0 %2115
        %v2117 = vsub.f32 %v2111, %v2116
        %v2118 = vmul.f32 %v2117, 1.442695
        %v2119 = vpow.pop %v2118
        %v2120 = vsel %vm583, %v2119, 0.0
        %2121 = vadd.xlane.f32.xlu0 %v2120
        %v2122 = vpop.xlane.xlu0 %2121
        %v2123 = vrcp.pop %v2122
        %v2124 = vmul.f32 %v2119, %v2123
        %v2126 = vsel %vm583, %v2124, 0
        %2128 = vmatprep.subr.mxu0 0.0
        %2129 = vmatpush1.msra.mxu0 0.0
        %2130 = vmatprep.subr.mxu0 0.0
        %2131 = vmatpush1.msra.mxu0 0.0
        %2132 = vmatprep.subr.mxu0 0.0
        %2133 = vmatpush1.msra.mxu0 0.0
        %2134 = vmatprep.subr.mxu0 0.0
        %2135 = vmatpush1.msra.mxu0 0.0
        %2136 = vmatprep.subr.mxu0 0.0
        %2137 = vmatpush1.msra.mxu0 0.0
        %2138 = vmatprep.subr.mxu0 0.0
        %2139 = vmatpush1.msra.mxu0 0.0
        %2140 = vmatprep.subr.mxu0 0.0
        %2141 = vmatpush1.msra.mxu0 0.0
        %2142 = vmatprep.subr.mxu0 0.0
        %2143 = vmatpush1.msra.mxu0 0.0
        %2144 = vmatprep.subr.mxu0 0.0
        %2145 = vmatpush1.msra.mxu0 0.0
        %2146 = vmatprep.subr.mxu0 0.0
        %2147 = vmatpush1.msra.mxu0 0.0
        %2148 = vmatprep.subr.mxu0 0.0
        %2149 = vmatpush1.msra.mxu0 0.0
        %2150 = vmatprep.subr.mxu0 0.0
        %2151 = vmatpush1.msra.mxu0 0.0
        %2152 = vmatprep.subr.mxu0 0.0
        %2153 = vmatpush1.msra.mxu0 0.0
        %2154 = vmatprep.subr.mxu0 0.0
        %2155 = vmatpush1.msra.mxu0 0.0
        %2156 = vmatprep.subr.mxu0 0.0
        %2157 = vmatpush1.msra.mxu0 0.0
        %2158 = vmatprep.subr.mxu0 0.0
        %2159 = vmatpush1.msra.mxu0 %v2035
        %2160 = vmatprep.subr.mxu0 0.0
        %2161 = vmatpush2.msra.mxu0 0.0
        %2162 = vmatprep.subr.mxu0 0.0
        %2163 = vmatpush2.msra.mxu0 0.0
        %2164 = vmatprep.subr.mxu0 0.0
        %2165 = vmatpush2.msra.mxu0 0.0
        %2166 = vmatprep.subr.mxu0 0.0
        %2167 = vmatpush2.msra.mxu0 0.0
        %2168 = vmatprep.subr.mxu0 0.0
        %2169 = vmatpush2.msra.mxu0 0.0
        %2170 = vmatprep.subr.mxu0 0.0
        %2171 = vmatpush2.msra.mxu0 0.0
        %2172 = vmatprep.subr.mxu0 0.0
        %2173 = vmatpush2.msra.mxu0 0.0
        %2174 = vmatprep.subr.mxu0 0.0
        %2175 = vmatpush2.msra.mxu0 0.0
        %2176 = vmatprep.subr.mxu0 0.0
        %2177 = vmatpush2.msra.mxu0 0.0
        %2178 = vmatprep.subr.mxu0 0.0
        %2179 = vmatpush2.msra.mxu0 0.0
        %2180 = vmatprep.subr.mxu0 0.0
        %2181 = vmatpush2.msra.mxu0 0.0
        %2182 = vmatprep.subr.mxu0 0.0
        %2183 = vmatpush2.msra.mxu0 0.0
        %2184 = vmatprep.subr.mxu0 0.0
        %2185 = vmatpush2.msra.mxu0 0.0
        %2186 = vmatprep.subr.mxu0 0.0
        %2187 = vmatpush2.msra.mxu0 0.0
        %2188 = vmatprep.subr.mxu0 0.0
        %2189 = vmatpush2.msra.mxu0 0.0
        %2190 = vmatprep.subr.mxu0 0.0
        %2191 = vmatpush2.msra.mxu0 0.0
        %2192 = vmatprep.mubr.f32.mxu0 0.0
        %2193 = vmatmul.mubr.f32.gmra.mxu0 %v2126
        %v2194 = vpop.f32.mrf.mxu0
        %v2195 = vadd.f32 0.0, %v2194
        %v2196 = vpop.f32.mrf.mxu0
        %2197 = vdwg.mxu0
        %s2198 = scalar_lea.vmem %s7, 24
        %v2199 = vld [vmem:[%s2198] sm:$0xff]
        %v2201 = vsel %vm583, %v2195, 0
        %2203 = vmatprep.subr.mxu0 0.0
        %2204 = vmatpush1.msra.mxu0 0.0
        %2205 = vmatprep.subr.mxu0 0.0
        %2206 = vmatpush1.msra.mxu0 0.0
        %2207 = vmatprep.subr.mxu0 0.0
        %2208 = vmatpush1.msra.mxu0 0.0
        %2209 = vmatprep.subr.mxu0 0.0
        %2210 = vmatpush1.msra.mxu0 0.0
        %2211 = vmatprep.subr.mxu0 0.0
        %2212 = vmatpush1.msra.mxu0 0.0
        %2213 = vmatprep.subr.mxu0 0.0
        %2214 = vmatpush1.msra.mxu0 0.0
        %2215 = vmatprep.subr.mxu0 0.0
        %2216 = vmatpush1.msra.mxu0 0.0
        %2217 = vmatprep.subr.mxu0 0.0
        %2218 = vmatpush1.msra.mxu0 0.0
        %2219 = vmatprep.subr.mxu0 0.0
        %2220 = vmatpush1.msra.mxu0 0.0
        %2221 = vmatprep.subr.mxu0 0.0
        %2222 = vmatpush1.msra.mxu0 0.0
        %2223 = vmatprep.subr.mxu0 0.0
        %2224 = vmatpush1.msra.mxu0 0.0
        %2225 = vmatprep.subr.mxu0 0.0
        %2226 = vmatpush1.msra.mxu0 0.0
        %2227 = vmatprep.subr.mxu0 0.0
        %2228 = vmatpush1.msra.mxu0 0.0
        %2229 = vmatprep.subr.mxu0 0.0
        %2230 = vmatpush1.msra.mxu0 0.0
        %2231 = vmatprep.subr.mxu0 0.0
        %2232 = vmatpush1.msra.mxu0 0.0
        %2233 = vmatprep.subr.mxu0 0.0
        %2234 = vmatpush1.msra.mxu0 %v2199
        %2235 = vmatprep.subr.mxu0 0.0
        %2236 = vmatpush2.msra.mxu0 0.0
        %2237 = vmatprep.subr.mxu0 0.0
        %2238 = vmatpush2.msra.mxu0 0.0
        %2239 = vmatprep.subr.mxu0 0.0
        %2240 = vmatpush2.msra.mxu0 0.0
        %2241 = vmatprep.subr.mxu0 0.0
        %2242 = vmatpush2.msra.mxu0 0.0
        %2243 = vmatprep.subr.mxu0 0.0
        %2244 = vmatpush2.msra.mxu0 0.0
        %2245 = vmatprep.subr.mxu0 0.0
        %2246 = vmatpush2.msra.mxu0 0.0
        %2247 = vmatprep.subr.mxu0 0.0
        %2248 = vmatpush2.msra.mxu0 0.0
        %2249 = vmatprep.subr.mxu0 0.0
        %2250 = vmatpush2.msra.mxu0 0.0
        %2251 = vmatprep.subr.mxu0 0.0
        %2252 = vmatpush2.msra.mxu0 0.0
        %2253 = vmatprep.subr.mxu0 0.0
        %2254 = vmatpush2.msra.mxu0 0.0
        %2255 = vmatprep.subr.mxu0 0.0
        %2256 = vmatpush2.msra.mxu0 0.0
        %2257 = vmatprep.subr.mxu0 0.0
        %2258 = vmatpush2.msra.mxu0 0.0
        %2259 = vmatprep.subr.mxu0 0.0
        %2260 = vmatpush2.msra.mxu0 0.0
        %2261 = vmatprep.subr.mxu0 0.0
        %2262 = vmatpush2.msra.mxu0 0.0
        %2263 = vmatprep.subr.mxu0 0.0
        %2264 = vmatpush2.msra.mxu0 0.0
        %2265 = vmatprep.subr.mxu0 0.0
        %2266 = vmatpush2.msra.mxu0 0.0
        %2267 = vmatprep.mubr.f32.mxu0 0.0
        %2268 = vmatmul.mubr.f32.gmra.mxu0 %v2201
        %v2269 = vpop.f32.mrf.mxu0
        %v2270 = vadd.f32 0.0, %v2269
        %v2271 = vpop.f32.mrf.mxu0
        %2272 = vdwg.mxu0
        %v2273 = vadd.f32 %v1788, %v2270
        %2274 = vst.msk [vmem:[%s323] sm:$0xff] %vm347, %v2273
        %s2275 = sand.u32 %s225, 1
        %s2276 = scalar_lea.sflag [#allocation3], %s2275
        %s2277 = sand.u32 %s225, 1
        %s2278 = smul.addr %s2277, 8
        %s2279 = scalar_lea.vmem [#allocation2], %s2278
        // Predicated region
        $region57: #{tpu_custom_call.1} parent=55 // pred_check
          %p2280 = pneg %p235
        $region58: #{tpu_custom_call.1} parent=55 // pred_check_branch
          %2282 = sbr.rel (%p2280) target = $region60
        $region59: #{tpu_custom_call.1} parent=55 // pred_region
          %s2284 = ssub.s32 128, 128
          %2285 = vsyncadd %s2276, %s2284
          %s2286 = smul.addr %s23, 128
          %s2287 = scalar_lea.hbm %s9, %s2286
          %s2289 = sshll.u32 %s2279, 4
          %s2290 = int_to_ptr.vmem [resolvable:$true] %s2289
          %2292 = dma.vmem_to_hbm [thread:$0]  %s2290, 128, %s2287, %s2276
        $region60: #{tpu_custom_call.1} parent=55 // pred_fallthru
          _
      $region56: #{tpu_custom_call.1} parent=5 // pred_fallthru
        _
      %p2293 = scmp.le.s32.totalorder 2, %s18
      // Predicated region
      $region61: #{tpu_custom_call.1} parent=5 // pred_check
        %p2294 = pneg %p2293
      $region62: #{tpu_custom_call.1} parent=5 // pred_check_branch
        %2296 = sbr.rel (%p2294) target = $region64
      $region63: #{tpu_custom_call.1} parent=5 // pred_region
        %s2297 = ssub.s32 %s18, 2
        // Predicated region
        $region65: #{tpu_custom_call.1} parent=63 // pred_check
          %p2298 = pneg %p241
        $region66: #{tpu_custom_call.1} parent=63 // pred_check_branch
          %2300 = sbr.rel (%p2298) target = $region68
        $region67: #{tpu_custom_call.1} parent=63 // pred_region
          %s2301 = sand.u32 %s226, 1
          %s2302 = scalar_lea.sflag [#allocation3], %s2301
          %s2303 = sand.u32 %s226, 1
          %s2304 = smul.addr %s2303, 8
          %s2305 = scalar_lea.vmem [#allocation2], %s2304
          %2306 = dma.done %s2302, 128
        $region68: #{tpu_custom_call.1} parent=63 // pred_fallthru
          _
      $region64: #{tpu_custom_call.1} parent=5 // pred_fallthru
        _
    $region6: #{tpu_custom_call.1} parent=1 // loop_footer
      %s22 = sadd.s32 1, %s18
    $region7: #{tpu_custom_call.1} parent=1 // loop_footer_branch
      %17 = sbr.rel target = $region3
    $region8: #{tpu_custom_call.1} parent=1 // loop_exit
      _
    %2307 = vsyncpa [#allocation3], 1
    %s2308 = scalar_lea.sflag [#allocation3], 1
    %2309 = vsyncpa %s2308, 1

</llo_original>
